<compile_context>
chip_gen: v7x
topology: tpu7x:2x2x1
jax: 0.10.0
libtpu: 0.0.40
codegen_flags: <defaults>
</compile_context>

<pallas_src>
import jax
import jax.numpy as jnp
from jax.experimental import pallas as pl
from jax.experimental.pallas import tpu as pltpu

EPS = 1e-5  # eps of nn.BatchNorm / nn.InstanceNorm


def _round_up(x, m):
    return pl.cdiv(x, m) * m


def _pick_spatial_tile(hw, target=512):
    """Largest multiple-of-8 divisor of hw that is <= target (else hw itself)."""
    if hw <= target:
        return hw
    for t in range(target - (target % 8), 7, -8):
        if hw % t == 0:
            return t
    return hw


def _vmem_limit_bytes(nbytes, floor=16 << 20, cap=48 << 20):
    # Explicit scoped-VMEM limit (see v7x note: 64 MiB physical, 32 MiB default).
    return int(min(max(4 * nbytes, floor), cap))


# ----------------------------------------------------------------------------
# Backbone stand-in (IBN-a style stem), tiled over the spatial axis.
# grid = (2, n_spatial_tiles): phase 0 accumulates stats, phase 1 normalizes/pools.
# ----------------------------------------------------------------------------
def backbone_kernel(x_ref, w1_ref, wproj_ref, ft_ref,
                    s_in, q_in, s_bn, q_bn, p_in, p_bn):
    phase = pl.program_id(0)
    s = pl.program_id(1)
    n_s = pl.num_programs(1)

    x = x_ref[...]                    # (B, Ts, C)
    w1 = w1_ref[...]                  # (C, C1)
    B, Ts, C = x.shape
    c_in = s_in.shape[-1]

    # 1x1 conv.  K = C is tiny (4): a padded MXU contraction would run at <4%
    # utilization, so compute it as C VPU broadcast-FMAs.  Fall back to a single
    # flattened contraction for larger C.
    if C <= 8:
        h = x[:, :, 0:1] * w1[0:1, :].reshape(1, 1, -1)
        for c in range(1, C):
            h = h + x[:, :, c:c + 1] * w1[c:c + 1, :].reshape(1, 1, -1)
    else:
        h = jax.lax.dot_general(x, w1, (((2,), (0,)), ((), ())),
                                preferred_element_type=jnp.float32)

    h_in = h[:, :, :c_in]             # InstanceNorm branch (per-sample, per-channel)
    h_bn = h[:, :, c_in:]             # BatchNorm branch   (per-channel over batch+spatial)

    @pl.when((phase == 0) & (s == 0))
    def _init():
        s_in[...] = jnp.zeros_like(s_in)
        q_in[...] = jnp.zeros_like(q_in)
        s_bn[...] = jnp.zeros_like(s_bn)
        q_bn[...] = jnp.zeros_like(q_bn)
        p_in[...] = jnp.zeros_like(p_in)
        p_bn[...] = jnp.zeros_like(p_bn)

    # ---- phase 0: single-pass (sum, sumsq) statistics --------------------------
    @pl.when(phase == 0)
    def _accum_stats():
        s_in[...] += jnp.sum(h_in, axis=1)
        q_in[...] += jnp.sum(h_in * h_in, axis=1)
        s_bn[...] += jnp.sum(h_bn, axis=(0, 1), keepdims=True).reshape(1, -1)
        q_bn[...] += jnp.sum(h_bn * h_bn, axis=(0, 1), keepdims=True).reshape(1, -1)

    # ---- phase 1, first tile: fold stats into per-channel (scale, shift) -------
    @pl.when((phase == 1) & (s == 0))
    def _finalize_stats():
        cnt_sp = Ts * n_s                 # spatial count per sample
        cnt_bn = cnt_sp * B               # batch * spatial
        mu_in = s_in[...] / cnt_sp
        var_in = q_in[...] / cnt_sp - mu_in * mu_in
        sc_in = jax.lax.rsqrt(var_in + EPS)
        s_in[...] = sc_in                 # reuse scratch: scale
        q_in[...] = -mu_in * sc_in        # reuse scratch: shift
        mu_bn = s_bn[...] / cnt_bn
        var_bn = q_bn[...] / cnt_bn - mu_bn * mu_bn
        sc_bn = jax.lax.rsqrt(var_bn + EPS)
        s_bn[...] = sc_bn
        q_bn[...] = -mu_bn * sc_bn

    # ---- phase 1: normalize (1 FMA/elem) + ReLU + pooled accumulation ----------
    @pl.when(phase == 1)
    def _norm_pool():
        y_in = jnp.maximum(h_in * s_in[...][:, None, :] + q_in[...][:, None, :], 0.0)
        y_bn = jnp.maximum(h_bn * s_bn[...][:, None, :] + q_bn[...][:, None, :], 0.0)
        p_in[...] += jnp.sum(y_in, axis=1)
        p_bn[...] += jnp.sum(y_bn, axis=1)

    # ---- phase 1, last tile: finish pooling and project to embedding_dim -------
    @pl.when((phase == 1) & (s == n_s - 1))
    def _project():
        inv_hw = 1.0 / (Ts * n_s)
        feats = jnp.concatenate([p_in[...], p_bn[...]], axis=-1) * inv_hw
        ft_ref[...] = jnp.dot(feats, wproj_ref[...],
                              preferred_element_type=jnp.float32)


# ----------------------------------------------------------------------------
# Head part 1: BatchNorm1d (training mode), computed once (hoisted out of the
# class-tile loop).  gamma*rsqrt folded into a per-channel scale/shift.
# ----------------------------------------------------------------------------
def bn1d_kernel(ft_ref, gamma_ref, beta_ref, fi_ref):
    f_t = ft_ref[...]                                   # (B, E)
    mu = jnp.mean(f_t, axis=0, keepdims=True)
    var = jnp.mean((f_t - mu) ** 2, axis=0, keepdims=True)   # biased, matches nn.BatchNorm1d
    scale = gamma_ref[...] * jax.lax.rsqrt(var + EPS)
    shift = beta_ref[...] - mu * scale
    fi_ref[...] = f_t * scale + shift


# ----------------------------------------------------------------------------
# Head part 2: bias-free Linear classifier, tiled over class tiles ("parallel").
# ----------------------------------------------------------------------------
def classifier_kernel(fi_ref, wcls_ref, out_ref):
    out_ref[...] = jnp.dot(fi_ref[...], wcls_ref[...],
                           preferred_element_type=jnp.float32)


def ibn_a_forward(x_nchw, w1, wproj, gamma, beta, wcls_t, *,
                  class_tile=256, spatial_tile=512):
    B, C, H, W = x_nchw.shape
    C1 = w1.shape[1]
    E = wproj.shape[1]
    N = wcls_t.shape[1]
    HW = H * W

    # NCHW -> (B, H*W, C): channels on the lane axis.
    x_cl = jnp.transpose(x_nchw, (0, 2, 3, 1)).reshape(B, HW, C)

    # ---------------- backbone (2-phase grid over spatial tiles) ----------------
    ts = _pick_spatial_tile(HW, spatial_tile)
    n_s = HW // ts
    c_in = C1 // 2
    c_bn = C1 - c_in

    bb_bytes = 4 * (2 * B * ts * C + C * C1 + C1 * E + B * E
                    + B * ts * C1 + 4 * B * c_in + 2 * c_bn + B * c_bn)
    f_t = pl.pallas_call(
        backbone_kernel,
        grid=(2, n_s),
        in_specs=[
            pl.BlockSpec((B, ts, C), lambda p, s: (0, s, 0)),   # x tile (auto double-buffered)
            pl.BlockSpec((C, C1), lambda p, s: (0, 0)),         # w1 (resident)
            pl.BlockSpec((C1, E), lambda p, s: (0, 0)),         # wproj (resident)
        ],
        out_specs=pl.BlockSpec((B, E), lambda p, s: (0, 0)),    # f_t, written on last step
        out_shape=jax.ShapeDtypeStruct((B, E), jnp.float32),
        scratch_shapes=[
            pltpu.VMEM((B, c_in), jnp.float32),   # IN sum   -> scale
            pltpu.VMEM((B, c_in), jnp.float32),   # IN sumsq -> shift
            pltpu.VMEM((1, c_bn), jnp.float32),   # BN sum   -> scale
            pltpu.VMEM((1, c_bn), jnp.float32),   # BN sumsq -> shift
            pltpu.VMEM((B, c_in), jnp.float32),   # pooled IN half
            pltpu.VMEM((B, c_bn), jnp.float32),   # pooled BN half
        ],
        compiler_params=pltpu.CompilerParams(
            dimension_semantics=("arbitrary", "arbitrary"),
            vmem_limit_bytes=_vmem_limit_bytes(bb_bytes)),
    )(x_cl, w1, wproj)

    # ---------------- head: BatchNorm1d once (not per class tile) ---------------
    f_i = pl.pallas_call(
        bn1d_kernel,
        out_shape=jax.ShapeDtypeStruct((B, E), jnp.float32),
    )(f_t, gamma, beta)

    # ---------------- head: classifier matmul, class tiles are independent ------
    class_tile = min(class_tile, _round_up(N, 128))
    n_pad = _round_up(N, class_tile)            # no divisibility assert: pad instead
    wcls_p = wcls_t if n_pad == N else jnp.pad(wcls_t, ((0, 0), (0, n_pad - N)))

    cls_bytes = 4 * (B * E + 2 * E * class_tile + 2 * B * class_tile)
    out = pl.pallas_call(
        classifier_kernel,
        grid=(n_pad // class_tile,),
        in_specs=[
            pl.BlockSpec((B, E), lambda j: (0, 0)),             # f_i (resident, read-only)
            pl.BlockSpec((E, class_tile), lambda j: (0, j)),    # W_cls tile
        ],
        out_specs=pl.BlockSpec((B, class_tile), lambda j: (0, j)),
        out_shape=jax.ShapeDtypeStruct((B, n_pad), jnp.float32),
        compiler_params=pltpu.CompilerParams(
            dimension_semantics=("parallel",),                  # shardable across TCs (v7x)
            vmem_limit_bytes=_vmem_limit_bytes(cls_bytes)),
    )(f_i, wcls_p)
    if n_pad != N:
        out = out[:, :N]

    return f_t, f_i, out


# ----------------------------------------------------------------------------
# Pure-JAX reference of the same math (correctness sanity check).
# ----------------------------------------------------------------------------
def ibn_a_reference(x_nchw, w1, wproj, gamma, beta, wcls_t):
    B, C, H, W = x_nchw.shape
    x_cl = jnp.transpose(x_nchw, (0, 2, 3, 1)).reshape(B, H * W, C)
    h = jnp.einsum("bsc,cd->bsd", x_cl, w1)
    half = h.shape[-1] // 2
    h_in, h_bn = h[:, :, :half], h[:, :, half:]
    mu_i = h_in.mean(axis=1, keepdims=True)
    var_i = ((h_in - mu_i) ** 2).mean(axis=1, keepdims=True)
    h_in = (h_in - mu_i) / jnp.sqrt(var_i + EPS)
    mu_b = h_bn.mean(axis=(0, 1), keepdims=True)
    var_b = ((h_bn - mu_b) ** 2).mean(axis=(0, 1), keepdims=True)
    h_bn = (h_bn - mu_b) / jnp.sqrt(var_b + EPS)
    feats = jnp.maximum(jnp.concatenate([h_in, h_bn], axis=-1), 0.0).mean(axis=1)
    f_t = feats @ wproj
    mu = f_t.mean(axis=0, keepdims=True)
    var = ((f_t - mu) ** 2).mean(axis=0, keepdims=True)
    f_i = (f_t - mu) / jnp.sqrt(var + EPS) * gamma + beta
    out = f_i @ wcls_t
    return f_t, f_i, out


if __name__ == "__main__":
    # Small shapes consistent with the module's forward (real: E=2048, N=576).
    B, C, H, W = 2, 4, 16, 16       # input image (NCHW, as in PyTorch)
    C1 = 256                        # stem channels (split 128 IN / 128 BN)
    E = 256                         # embedding_dim (kept small)
    N = 128                         # num_classes  (kept small)

    key = jax.random.PRNGKey(0)
    kx, k1, k2, k3 = jax.random.split(key, 4)

    x = jax.random.normal(kx, (B, C, H, W), dtype=jnp.float32)

    w1 = jax.random.normal(k1, (C, C1), dtype=jnp.float32) * jnp.sqrt(2.0 / C)
    wproj = jax.random.normal(k2, (C1, E), dtype=jnp.float32) * jnp.sqrt(2.0 / C1)
    gamma = jnp.ones((1, E), dtype=jnp.float32)    # BatchNorm1d weight = 1 (kaiming init)
    beta = jnp.zeros((1, E), dtype=jnp.float32)    # BatchNorm1d bias   = 0 (frozen)
    wcls = jax.random.normal(k3, (N, E), dtype=jnp.float32) * 0.001   # classifier init
    wcls_t = wcls.T                                # (E, N)

    # spatial_tile=128 so the toy run exercises the multi-tile accumulation path.
    f_t, f_i, out = ibn_a_forward(x, w1, wproj, gamma, beta, wcls_t,
                                  class_tile=256, spatial_tile=128)
    jax.block_until_ready((f_t, f_i, out))

    r_ft, r_fi, r_out = ibn_a_reference(x, w1, wproj, gamma, beta, wcls_t)
    assert f_t.shape == (B, E) and f_i.shape == (B, E) and out.shape == (B, N)
    assert jnp.allclose(f_t, r_ft, rtol=1e-3, atol=1e-3)
    assert jnp.allclose(f_i, r_fi, rtol=1e-3, atol=1e-3)
    assert jnp.allclose(out, r_out, rtol=1e-3, atol=1e-3)

    print("KERNEL_OK")
</pallas_src>

<mosaic_0001>
module attributes {stable_mosaic.version = 11 : i64} {
  func.func @backbone_kernel(%arg0: i32, %arg1: i32, %arg2: memref<2x128x4xf32, #tpu.memory_space<vmem>>, %arg3: memref<4x256xf32, #tpu.memory_space<vmem>>, %arg4: memref<256x256xf32, #tpu.memory_space<vmem>>, %arg5: memref<2x256xf32, #tpu.memory_space<vmem>>, %arg6: memref<2x128xf32, #tpu.memory_space<vmem>>, %arg7: memref<2x128xf32, #tpu.memory_space<vmem>>, %arg8: memref<1x128xf32, #tpu.memory_space<vmem>>, %arg9: memref<1x128xf32, #tpu.memory_space<vmem>>, %arg10: memref<2x128xf32, #tpu.memory_space<vmem>>, %arg11: memref<2x128xf32, #tpu.memory_space<vmem>>) attributes {dimension_semantics = [#tpu.dimension_semantics<arbitrary>, #tpu.dimension_semantics<arbitrary>], iteration_bounds = array<i64: 2, 2>, scalar_prefetch = 0 : i64, scratch_operands = 6 : i64, tpu.core_type = #tpu.core_type<tc>, window_params = [{transform_indices = @transform_0, window_bounds = array<i64: 2, 128, 4>}, {pipeline_mode = #tpu.pipeline_mode<synchronous>, transform_indices = @transform_1, window_bounds = array<i64: 4, 256>}, {pipeline_mode = #tpu.pipeline_mode<synchronous>, transform_indices = @transform_2, window_bounds = array<i64: 256, 256>}, {pipeline_mode = #tpu.pipeline_mode<synchronous>, transform_indices = @transform_3, window_bounds = array<i64: 2, 256>}]} {
    %c0 = arith.constant 0 : index
    %c0_0 = arith.constant 0 : index
    %c0_1 = arith.constant 0 : index
    %0 = vector.load %arg2[%c0, %c0_0, %c0_1] : memref<2x128x4xf32, #tpu.memory_space<vmem>>, vector<2x128x4xf32>
    %c0_2 = arith.constant 0 : index
    %c0_3 = arith.constant 0 : index
    %1 = vector.load %arg3[%c0_2, %c0_3] : memref<4x256xf32, #tpu.memory_space<vmem>>, vector<4x256xf32>
    %2 = vector.extract_strided_slice %0 {offsets = [0, 0, 0], sizes = [2, 128, 1], strides = [1, 1, 1]} : vector<2x128x4xf32> to vector<2x128x1xf32>
    %3 = vector.extract_strided_slice %1 {offsets = [0, 0], sizes = [1, 256], strides = [1, 1]} : vector<4x256xf32> to vector<1x256xf32>
    %4 = vector.shape_cast %3 : vector<1x256xf32> to vector<1x1x256xf32>
    %5 = vector.broadcast %2 : vector<2x128x1xf32> to vector<2x128x256xf32>
    %6 = vector.broadcast %4 : vector<1x1x256xf32> to vector<2x128x256xf32>
    %7 = arith.mulf %5, %6 : vector<2x128x256xf32>
    %8 = vector.extract_strided_slice %0 {offsets = [0, 0, 1], sizes = [2, 128, 1], strides = [1, 1, 1]} : vector<2x128x4xf32> to vector<2x128x1xf32>
    %9 = vector.extract_strided_slice %1 {offsets = [1, 0], sizes = [1, 256], strides = [1, 1]} : vector<4x256xf32> to vector<1x256xf32>
    %10 = vector.shape_cast %9 : vector<1x256xf32> to vector<1x1x256xf32>
    %11 = vector.broadcast %8 : vector<2x128x1xf32> to vector<2x128x256xf32>
    %12 = vector.broadcast %10 : vector<1x1x256xf32> to vector<2x128x256xf32>
    %13 = arith.mulf %11, %12 : vector<2x128x256xf32>
    %14 = arith.addf %7, %13 : vector<2x128x256xf32>
    %15 = vector.extract_strided_slice %0 {offsets = [0, 0, 2], sizes = [2, 128, 1], strides = [1, 1, 1]} : vector<2x128x4xf32> to vector<2x128x1xf32>
    %16 = vector.extract_strided_slice %1 {offsets = [2, 0], sizes = [1, 256], strides = [1, 1]} : vector<4x256xf32> to vector<1x256xf32>
    %17 = vector.shape_cast %16 : vector<1x256xf32> to vector<1x1x256xf32>
    %18 = vector.broadcast %15 : vector<2x128x1xf32> to vector<2x128x256xf32>
    %19 = vector.broadcast %17 : vector<1x1x256xf32> to vector<2x128x256xf32>
    %20 = arith.mulf %18, %19 : vector<2x128x256xf32>
    %21 = arith.addf %14, %20 : vector<2x128x256xf32>
    %22 = vector.extract_strided_slice %0 {offsets = [0, 0, 3], sizes = [2, 128, 1], strides = [1, 1, 1]} : vector<2x128x4xf32> to vector<2x128x1xf32>
    %23 = vector.extract_strided_slice %1 {offsets = [3, 0], sizes = [1, 256], strides = [1, 1]} : vector<4x256xf32> to vector<1x256xf32>
    %24 = vector.shape_cast %23 : vector<1x256xf32> to vector<1x1x256xf32>
    %25 = vector.broadcast %22 : vector<2x128x1xf32> to vector<2x128x256xf32>
    %26 = vector.broadcast %24 : vector<1x1x256xf32> to vector<2x128x256xf32>
    %27 = arith.mulf %25, %26 : vector<2x128x256xf32>
    %28 = arith.addf %21, %27 : vector<2x128x256xf32>
    %29 = vector.extract_strided_slice %28 {offsets = [0, 0, 0], sizes = [2, 128, 128], strides = [1, 1, 1]} : vector<2x128x256xf32> to vector<2x128x128xf32>
    %30 = vector.extract_strided_slice %28 {offsets = [0, 0, 128], sizes = [2, 128, 128], strides = [1, 1, 1]} : vector<2x128x256xf32> to vector<2x128x128xf32>
    %c0_i32 = arith.constant 0 : i32
    %31 = arith.cmpi eq, %arg0, %c0_i32 : i32
    %c0_i32_4 = arith.constant 0 : i32
    %32 = arith.cmpi eq, %arg1, %c0_i32_4 : i32
    %33 = arith.andi %31, %32 : i1
    %34 = arith.extui %33 : i1 to i32
    %c0_i32_5 = arith.constant 0 : i32
    %35 = arith.cmpi ne, %34, %c0_i32_5 : i32
    scf.if %35 {
      %cst = arith.constant 0.000000e+00 : f32
      %52 = vector.broadcast %cst : f32 to vector<2x128xf32>
      %c0_15 = arith.constant 0 : index
      %c0_16 = arith.constant 0 : index
      %53 = vector.load %arg6[%c0_15, %c0_16] : memref<2x128xf32, #tpu.memory_space<vmem>>, vector<2x128xf32>
      tpu.vector_store %arg6[%c0_15, %c0_16], %52 {strides = array<i32>} : memref<2x128xf32, #tpu.memory_space<vmem>>, vector<2x128xf32>,
      %cst_17 = arith.constant 0.000000e+00 : f32
      %54 = vector.broadcast %cst_17 : f32 to vector<2x128xf32>
      %c0_18 = arith.constant 0 : index
      %c0_19 = arith.constant 0 : index
      %55 = vector.load %arg7[%c0_18, %c0_19] : memref<2x128xf32, #tpu.memory_space<vmem>>, vector<2x128xf32>
      tpu.vector_store %arg7[%c0_18, %c0_19], %54 {strides = array<i32>} : memref<2x128xf32, #tpu.memory_space<vmem>>, vector<2x128xf32>,
      %cst_20 = arith.constant 0.000000e+00 : f32
      %56 = vector.broadcast %cst_20 : f32 to vector<1x128xf32>
      %c0_21 = arith.constant 0 : index
      %c0_22 = arith.constant 0 : index
      %57 = vector.load %arg8[%c0_21, %c0_22] : memref<1x128xf32, #tpu.memory_space<vmem>>, vector<1x128xf32>
      tpu.vector_store %arg8[%c0_21, %c0_22], %56 {strides = array<i32>} : memref<1x128xf32, #tpu.memory_space<vmem>>, vector<1x128xf32>,
      %cst_23 = arith.constant 0.000000e+00 : f32
      %58 = vector.broadcast %cst_23 : f32 to vector<1x128xf32>
      %c0_24 = arith.constant 0 : index
      %c0_25 = arith.constant 0 : index
      %59 = vector.load %arg9[%c0_24, %c0_25] : memref<1x128xf32, #tpu.memory_space<vmem>>, vector<1x128xf32>
      tpu.vector_store %arg9[%c0_24, %c0_25], %58 {strides = array<i32>} : memref<1x128xf32, #tpu.memory_space<vmem>>, vector<1x128xf32>,
      %cst_26 = arith.constant 0.000000e+00 : f32
      %60 = vector.broadcast %cst_26 : f32 to vector<2x128xf32>
      %c0_27 = arith.constant 0 : index
      %c0_28 = arith.constant 0 : index
      %61 = vector.load %arg10[%c0_27, %c0_28] : memref<2x128xf32, #tpu.memory_space<vmem>>, vector<2x128xf32>
      tpu.vector_store %arg10[%c0_27, %c0_28], %60 {strides = array<i32>} : memref<2x128xf32, #tpu.memory_space<vmem>>, vector<2x128xf32>,
      %cst_29 = arith.constant 0.000000e+00 : f32
      %62 = vector.broadcast %cst_29 : f32 to vector<2x128xf32>
      %c0_30 = arith.constant 0 : index
      %c0_31 = arith.constant 0 : index
      %63 = vector.load %arg11[%c0_30, %c0_31] : memref<2x128xf32, #tpu.memory_space<vmem>>, vector<2x128xf32>
      tpu.vector_store %arg11[%c0_30, %c0_31], %62 {strides = array<i32>} : memref<2x128xf32, #tpu.memory_space<vmem>>, vector<2x128xf32>,
    } else {
    }
    %c0_i32_6 = arith.constant 0 : i32
    %36 = arith.cmpi eq, %arg0, %c0_i32_6 : i32
    %37 = arith.extui %36 : i1 to i32
    %c0_i32_7 = arith.constant 0 : i32
    %38 = arith.cmpi ne, %37, %c0_i32_7 : i32
    scf.if %38 {
      %c0_15 = arith.constant 0 : index
      %c0_16 = arith.constant 0 : index
      %52 = vector.load %arg6[%c0_15, %c0_16] : memref<2x128xf32, #tpu.memory_space<vmem>>, vector<2x128xf32>
      %cst = arith.constant dense<0.000000e+00> : vector<2x128xf32>
      %53 = vector.multi_reduction <add>, %29, %cst [1] : vector<2x128x128xf32> to vector<2x128xf32>
      %54 = arith.addf %52, %53 : vector<2x128xf32>
      %c0_17 = arith.constant 0 : index
      %c0_18 = arith.constant 0 : index
      %55 = vector.load %arg6[%c0_17, %c0_18] : memref<2x128xf32, #tpu.memory_space<vmem>>, vector<2x128xf32>
      tpu.vector_store %arg6[%c0_17, %c0_18], %54 {strides = array<i32>} : memref<2x128xf32, #tpu.memory_space<vmem>>, vector<2x128xf32>,
      %c0_19 = arith.constant 0 : index
      %c0_20 = arith.constant 0 : index
      %56 = vector.load %arg7[%c0_19, %c0_20] : memref<2x128xf32, #tpu.memory_space<vmem>>, vector<2x128xf32>
      %57 = arith.mulf %29, %29 : vector<2x128x128xf32>
      %cst_21 = arith.constant dense<0.000000e+00> : vector<2x128xf32>
      %58 = vector.multi_reduction <add>, %57, %cst_21 [1] : vector<2x128x128xf32> to vector<2x128xf32>
      %59 = arith.addf %56, %58 : vector<2x128xf32>
      %c0_22 = arith.constant 0 : index
      %c0_23 = arith.constant 0 : index
      %60 = vector.load %arg7[%c0_22, %c0_23] : memref<2x128xf32, #tpu.memory_space<vmem>>, vector<2x128xf32>
      tpu.vector_store %arg7[%c0_22, %c0_23], %59 {strides = array<i32>} : memref<2x128xf32, #tpu.memory_space<vmem>>, vector<2x128xf32>,
      %c0_24 = arith.constant 0 : index
      %c0_25 = arith.constant 0 : index
      %61 = vector.load %arg8[%c0_24, %c0_25] : memref<1x128xf32, #tpu.memory_space<vmem>>, vector<1x128xf32>
      %cst_26 = arith.constant dense<0.000000e+00> : vector<128xf32>
      %62 = vector.multi_reduction <add>, %30, %cst_26 [0, 1] : vector<2x128x128xf32> to vector<128xf32>
      %63 = vector.shape_cast %62 : vector<128xf32> to vector<1x1x128xf32>
      %64 = vector.shape_cast %63 : vector<1x1x128xf32> to vector<1x128xf32>
      %65 = arith.addf %61, %64 : vector<1x128xf32>
      %c0_27 = arith.constant 0 : index
      %c0_28 = arith.constant 0 : index
      %66 = vector.load %arg8[%c0_27, %c0_28] : memref<1x128xf32, #tpu.memory_space<vmem>>, vector<1x128xf32>
      tpu.vector_store %arg8[%c0_27, %c0_28], %65 {strides = array<i32>} : memref<1x128xf32, #tpu.memory_space<vmem>>, vector<1x128xf32>,
      %c0_29 = arith.constant 0 : index
      %c0_30 = arith.constant 0 : index
      %67 = vector.load %arg9[%c0_29, %c0_30] : memref<1x128xf32, #tpu.memory_space<vmem>>, vector<1x128xf32>
      %68 = arith.mulf %30, %30 : vector<2x128x128xf32>
      %cst_31 = arith.constant dense<0.000000e+00> : vector<128xf32>
      %69 = vector.multi_reduction <add>, %68, %cst_31 [0, 1] : vector<2x128x128xf32> to vector<128xf32>
      %70 = vector.shape_cast %69 : vector<128xf32> to vector<1x1x128xf32>
      %71 = vector.shape_cast %70 : vector<1x1x128xf32> to vector<1x128xf32>
      %72 = arith.addf %67, %71 : vector<1x128xf32>
      %c0_32 = arith.constant 0 : index
      %c0_33 = arith.constant 0 : index
      %73 = vector.load %arg9[%c0_32, %c0_33] : memref<1x128xf32, #tpu.memory_space<vmem>>, vector<1x128xf32>
      tpu.vector_store %arg9[%c0_32, %c0_33], %72 {strides = array<i32>} : memref<1x128xf32, #tpu.memory_space<vmem>>, vector<1x128xf32>,
    } else {
    }
    %c1_i32 = arith.constant 1 : i32
    %39 = arith.cmpi eq, %arg0, %c1_i32 : i32
    %c0_i32_8 = arith.constant 0 : i32
    %40 = arith.cmpi eq, %arg1, %c0_i32_8 : i32
    %41 = arith.andi %39, %40 : i1
    %42 = arith.extui %41 : i1 to i32
    %c0_i32_9 = arith.constant 0 : i32
    %43 = arith.cmpi ne, %42, %c0_i32_9 : i32
    scf.if %43 {
      %c0_15 = arith.constant 0 : index
      %c0_16 = arith.constant 0 : index
      %52 = vector.load %arg6[%c0_15, %c0_16] : memref<2x128xf32, #tpu.memory_space<vmem>>, vector<2x128xf32>
      %cst = arith.constant 2.560000e+02 : f32
      %53 = vector.broadcast %cst : f32 to vector<2x128xf32>
      %54 = arith.divf %52, %53 : vector<2x128xf32>
      %c0_17 = arith.constant 0 : index
      %c0_18 = arith.constant 0 : index
      %55 = vector.load %arg7[%c0_17, %c0_18] : memref<2x128xf32, #tpu.memory_space<vmem>>, vector<2x128xf32>
      %cst_19 = arith.constant 2.560000e+02 : f32
      %56 = vector.broadcast %cst_19 : f32 to vector<2x128xf32>
      %57 = arith.divf %55, %56 : vector<2x128xf32>
      %58 = arith.mulf %54, %54 : vector<2x128xf32>
      %59 = arith.subf %57, %58 : vector<2x128xf32>
      %cst_20 = arith.constant 9.99999974E-6 : f32
      %60 = vector.broadcast %cst_20 : f32 to vector<2x128xf32>
      %61 = arith.addf %59, %60 : vector<2x128xf32>
      %62 = math.rsqrt %61 : vector<2x128xf32>
      %c0_21 = arith.constant 0 : index
      %c0_22 = arith.constant 0 : index
      %63 = vector.load %arg6[%c0_21, %c0_22] : memref<2x128xf32, #tpu.memory_space<vmem>>, vector<2x128xf32>
      tpu.vector_store %arg6[%c0_21, %c0_22], %62 {strides = array<i32>} : memref<2x128xf32, #tpu.memory_space<vmem>>, vector<2x128xf32>,
      %cst_23 = arith.constant 0.000000e+00 : f32
      %64 = vector.broadcast %cst_23 : f32 to vector<2x128xf32>
      %65 = arith.subf %64, %54 : vector<2x128xf32>
      %66 = arith.mulf %65, %62 : vector<2x128xf32>
      %c0_24 = arith.constant 0 : index
      %c0_25 = arith.constant 0 : index
      %67 = vector.load %arg7[%c0_24, %c0_25] : memref<2x128xf32, #tpu.memory_space<vmem>>, vector<2x128xf32>
      tpu.vector_store %arg7[%c0_24, %c0_25], %66 {strides = array<i32>} : memref<2x128xf32, #tpu.memory_space<vmem>>, vector<2x128xf32>,
      %c0_26 = arith.constant 0 : index
      %c0_27 = arith.constant 0 : index
      %68 = vector.load %arg8[%c0_26, %c0_27] : memref<1x128xf32, #tpu.memory_space<vmem>>, vector<1x128xf32>
      %cst_28 = arith.constant 5.120000e+02 : f32
      %69 = vector.broadcast %cst_28 : f32 to vector<1x128xf32>
      %70 = arith.divf %68, %69 : vector<1x128xf32>
      %c0_29 = arith.constant 0 : index
      %c0_30 = arith.constant 0 : index
      %71 = vector.load %arg9[%c0_29, %c0_30] : memref<1x128xf32, #tpu.memory_space<vmem>>, vector<1x128xf32>
      %cst_31 = arith.constant 5.120000e+02 : f32
      %72 = vector.broadcast %cst_31 : f32 to vector<1x128xf32>
      %73 = arith.divf %71, %72 : vector<1x128xf32>
      %74 = arith.mulf %70, %70 : vector<1x128xf32>
      %75 = arith.subf %73, %74 : vector<1x128xf32>
      %cst_32 = arith.constant 9.99999974E-6 : f32
      %76 = vector.broadcast %cst_32 : f32 to vector<1x128xf32>
      %77 = arith.addf %75, %76 : vector<1x128xf32>
      %78 = math.rsqrt %77 : vector<1x128xf32>
      %c0_33 = arith.constant 0 : index
      %c0_34 = arith.constant 0 : index
      %79 = vector.load %arg8[%c0_33, %c0_34] : memref<1x128xf32, #tpu.memory_space<vmem>>, vector<1x128xf32>
      tpu.vector_store %arg8[%c0_33, %c0_34], %78 {strides = array<i32>} : memref<1x128xf32, #tpu.memory_space<vmem>>, vector<1x128xf32>,
      %cst_35 = arith.constant 0.000000e+00 : f32
      %80 = vector.broadcast %cst_35 : f32 to vector<1x128xf32>
      %81 = arith.subf %80, %70 : vector<1x128xf32>
      %82 = arith.mulf %81, %78 : vector<1x128xf32>
      %c0_36 = arith.constant 0 : index
      %c0_37 = arith.constant 0 : index
      %83 = vector.load %arg9[%c0_36, %c0_37] : memref<1x128xf32, #tpu.memory_space<vmem>>, vector<1x128xf32>
      tpu.vector_store %arg9[%c0_36, %c0_37], %82 {strides = array<i32>} : memref<1x128xf32, #tpu.memory_space<vmem>>, vector<1x128xf32>,
    } else {
    }
    %c1_i32_10 = arith.constant 1 : i32
    %44 = arith.cmpi eq, %arg0, %c1_i32_10 : i32
    %45 = arith.extui %44 : i1 to i32
    %c0_i32_11 = arith.constant 0 : i32
    %46 = arith.cmpi ne, %45, %c0_i32_11 : i32
    scf.if %46 {
      %c0_15 = arith.constant 0 : index
      %c0_16 = arith.constant 0 : index
      %52 = vector.load %arg6[%c0_15, %c0_16] : memref<2x128xf32, #tpu.memory_space<vmem>>, vector<2x128xf32>
      %53 = vector.shape_cast %52 : vector<2x128xf32> to vector<2x1x128xf32>
      %54 = vector.broadcast %53 : vector<2x1x128xf32> to vector<2x128x128xf32>
      %55 = arith.mulf %29, %54 : vector<2x128x128xf32>
      %c0_17 = arith.constant 0 : index
      %c0_18 = arith.constant 0 : index
      %56 = vector.load %arg7[%c0_17, %c0_18] : memref<2x128xf32, #tpu.memory_space<vmem>>, vector<2x128xf32>
      %57 = vector.shape_cast %56 : vector<2x128xf32> to vector<2x1x128xf32>
      %58 = vector.broadcast %57 : vector<2x1x128xf32> to vector<2x128x128xf32>
      %59 = arith.addf %55, %58 : vector<2x128x128xf32>
      %cst = arith.constant 0.000000e+00 : f32
      %60 = vector.broadcast %cst : f32 to vector<2x128x128xf32>
      %61 = arith.maximumf %59, %60 : vector<2x128x128xf32>
      %c0_19 = arith.constant 0 : index
      %c0_20 = arith.constant 0 : index
      %62 = vector.load %arg8[%c0_19, %c0_20] : memref<1x128xf32, #tpu.memory_space<vmem>>, vector<1x128xf32>
      %63 = vector.shape_cast %62 : vector<1x128xf32> to vector<1x1x128xf32>
      %64 = vector.broadcast %63 : vector<1x1x128xf32> to vector<2x128x128xf32>
      %65 = arith.mulf %30, %64 : vector<2x128x128xf32>
      %c0_21 = arith.constant 0 : index
      %c0_22 = arith.constant 0 : index
      %66 = vector.load %arg9[%c0_21, %c0_22] : memref<1x128xf32, #tpu.memory_space<vmem>>, vector<1x128xf32>
      %67 = vector.shape_cast %66 : vector<1x128xf32> to vector<1x1x128xf32>
      %68 = vector.broadcast %67 : vector<1x1x128xf32> to vector<2x128x128xf32>
      %69 = arith.addf %65, %68 : vector<2x128x128xf32>
      %cst_23 = arith.constant 0.000000e+00 : f32
      %70 = vector.broadcast %cst_23 : f32 to vector<2x128x128xf32>
      %71 = arith.maximumf %69, %70 : vector<2x128x128xf32>
      %c0_24 = arith.constant 0 : index
      %c0_25 = arith.constant 0 : index
      %72 = vector.load %arg10[%c0_24, %c0_25] : memref<2x128xf32, #tpu.memory_space<vmem>>, vector<2x128xf32>
      %cst_26 = arith.constant dense<0.000000e+00> : vector<2x128xf32>
      %73 = vector.multi_reduction <add>, %61, %cst_26 [1] : vector<2x128x128xf32> to vector<2x128xf32>
      %74 = arith.addf %72, %73 : vector<2x128xf32>
      %c0_27 = arith.constant 0 : index
      %c0_28 = arith.constant 0 : index
      %75 = vector.load %arg10[%c0_27, %c0_28] : memref<2x128xf32, #tpu.memory_space<vmem>>, vector<2x128xf32>
      tpu.vector_store %arg10[%c0_27, %c0_28], %74 {strides = array<i32>} : memref<2x128xf32, #tpu.memory_space<vmem>>, vector<2x128xf32>,
      %c0_29 = arith.constant 0 : index
      %c0_30 = arith.constant 0 : index
      %76 = vector.load %arg11[%c0_29, %c0_30] : memref<2x128xf32, #tpu.memory_space<vmem>>, vector<2x128xf32>
      %cst_31 = arith.constant dense<0.000000e+00> : vector<2x128xf32>
      %77 = vector.multi_reduction <add>, %71, %cst_31 [1] : vector<2x128x128xf32> to vector<2x128xf32>
      %78 = arith.addf %76, %77 : vector<2x128xf32>
      %c0_32 = arith.constant 0 : index
      %c0_33 = arith.constant 0 : index
      %79 = vector.load %arg11[%c0_32, %c0_33] : memref<2x128xf32, #tpu.memory_space<vmem>>, vector<2x128xf32>
      tpu.vector_store %arg11[%c0_32, %c0_33], %78 {strides = array<i32>} : memref<2x128xf32, #tpu.memory_space<vmem>>, vector<2x128xf32>,
    } else {
    }
    %c1_i32_12 = arith.constant 1 : i32
    %47 = arith.cmpi eq, %arg0, %c1_i32_12 : i32
    %c1_i32_13 = arith.constant 1 : i32
    %48 = arith.cmpi eq, %arg1, %c1_i32_13 : i32
    %49 = arith.andi %47, %48 : i1
    %50 = arith.extui %49 : i1 to i32
    %c0_i32_14 = arith.constant 0 : i32
    %51 = arith.cmpi ne, %50, %c0_i32_14 : i32
    scf.if %51 {
      %c0_15 = arith.constant 0 : index
      %c0_16 = arith.constant 0 : index
      %52 = vector.load %arg10[%c0_15, %c0_16] : memref<2x128xf32, #tpu.memory_space<vmem>>, vector<2x128xf32>
      %c0_17 = arith.constant 0 : index
      %c0_18 = arith.constant 0 : index
      %53 = vector.load %arg11[%c0_17, %c0_18] : memref<2x128xf32, #tpu.memory_space<vmem>>, vector<2x128xf32>
      %54 = tpu.concatenate %52, %53 in 1 : vector<2x128xf32>, vector<2x128xf32> -> vector<2x256xf32>
      %cst = arith.constant 3.906250e-03 : f32
      %55 = vector.broadcast %cst : f32 to vector<2x256xf32>
      %56 = arith.mulf %54, %55 : vector<2x256xf32>
      %c0_19 = arith.constant 0 : index
      %c0_20 = arith.constant 0 : index
      %57 = vector.load %arg4[%c0_19, %c0_20] : memref<256x256xf32, #tpu.memory_space<vmem>>, vector<256x256xf32>
      %cst_21 = arith.constant dense<0.000000e+00> : vector<2x256xf32>
      %58 = tpu.matmul %56, %57, %cst_21 {dimension_numbers = #tpu.dot_dimension_numbers<[1], [0], [0], [1], [0, 0, 1, 1], [], []>} : vector<2x256xf32>, vector<256x256xf32>, vector<2x256xf32> -> vector<2x256xf32>
      %c0_22 = arith.constant 0 : index
      %c0_23 = arith.constant 0 : index
      %59 = vector.load %arg5[%c0_22, %c0_23] : memref<2x256xf32, #tpu.memory_space<vmem>>, vector<2x256xf32>
      tpu.vector_store %arg5[%c0_22, %c0_23], %58 {strides = array<i32>} : memref<2x256xf32, #tpu.memory_space<vmem>>, vector<2x256xf32>,
    } else {
    }
    return
  }
  func.func @transform_0(%arg0: i32, %arg1: i32) -> (i32, i32, i32) {
    %c0_i32 = arith.constant 0 : i32
    %c0_i32_0 = arith.constant 0 : i32
    %c0_i32_1 = arith.constant 0 : i32
    return %c0_i32, %arg1, %c0_i32_0 : i32, i32, i32
  }
  func.func @transform_1(%arg0: i32, %arg1: i32) -> (i32, i32) {
    %c0_i32 = arith.constant 0 : i32
    %c0_i32_0 = arith.constant 0 : i32
    %c0_i32_1 = arith.constant 0 : i32
    return %c0_i32, %c0_i32_0 : i32, i32
  }
  func.func @transform_2(%arg0: i32, %arg1: i32) -> (i32, i32) {
    %c0_i32 = arith.constant 0 : i32
    %c0_i32_0 = arith.constant 0 : i32
    %c0_i32_1 = arith.constant 0 : i32
    return %c0_i32, %c0_i32_0 : i32, i32
  }
  func.func @transform_3(%arg0: i32, %arg1: i32) -> (i32, i32) {
    %c0_i32 = arith.constant 0 : i32
    %c0_i32_0 = arith.constant 0 : i32
    %c0_i32_1 = arith.constant 0 : i32
    return %c0_i32, %c0_i32_0 : i32, i32
  }
}

</mosaic_0001>

<llo_original>
// kernel: tpu_custom_call.1
$region0: #{tpu_custom_call.1}
  #allocation0 [shape = 'u32[]', space=smem, size = 0x4, offset = 0x4, fixed_abs, tag = 'smem constant byte address 0x4 - core index']
  #allocation1 [shape = 'u32[144,128]{1,0:T(1,128)}', space=vmem, size = 0x12000, scoped, tag = 'internal scratch']
  #allocation2 [shape = 'f32[2,128]{1,0:T(2,128)}', space=vmem, size = 0x400, scoped, tag = 'scratch operand']
  #allocation3 [shape = 'f32[2,128]{1,0:T(2,128)}', space=vmem, size = 0x400, scoped, tag = 'scratch operand']
  #allocation4 [shape = 'f32[1,128]{1,0:T(1,128)}', space=vmem, size = 0x200, scoped, tag = 'scratch operand']
  #allocation5 [shape = 'f32[1,128]{1,0:T(1,128)}', space=vmem, size = 0x200, scoped, tag = 'scratch operand']
  #allocation6 [shape = 'f32[2,128]{1,0:T(2,128)}', space=vmem, size = 0x400, scoped, tag = 'scratch operand']
  #allocation7 [shape = 'f32[2,128]{1,0:T(2,128)}', space=vmem, size = 0x400, scoped, tag = 'scratch operand']
  %s0 = inlined_call_operand.vmem [shape: f32[2,256,4], index: 0, kind: input, shape index: {}]
  %s1 = inlined_call_operand.vmem [shape: f32[4,256], index: 1, kind: input, shape index: {}]
  %s2 = inlined_call_operand.vmem [shape: f32[256,256], index: 2, kind: input, shape index: {}]
  %s3 = inlined_call_operand.hbm [shape: f32[2,256], index: 3, kind: output, shape index: {}]
  %s4 = sld [smem:[#allocation0]]
  $region103: #{tpu_custom_call.1} parent=0
    _
  %s6 = ssub.s32 1, %s4
  %s7 = scalar_select 0, %s6, %s4
  $region1: #{tpu_custom_call.1} parent=0
    #allocation8 [shape = 'u8[262144]{0}', space=vmem, size = 0x40000, scoped, tag = 'input window, operand 0']
    #allocation9 [shape = 'u8[2048]{0}', space=vmem, size = 0x800, scoped, tag = 'output window, operand 0, single buffered']
    #allocation10 [shape = 's32[2]{0}', space=sflag, size = 0x8, scoped, tag = 'scoped memory for tpu_custom_call.1']
    %8 = vsyncpa [#allocation10], 0
    loop: start=0, step=1, limit=6
    $region2: #{tpu_custom_call.1} parent=1 // loop_pre_header
      _
    $region3: #{tpu_custom_call.1} parent=1 // loop_header
      %s10 = sphi 0, %s14
      %p11 = scmp.ge.s32.totalorder %s10, 6
      %s17 = sphi 0, %s29
      %s18 = sphi 0, %s25
      %s19 = sphi 0, %s17
      %s20 = sphi 0, %s18
      %s21 = sphi 0, %s19
      %s22 = sphi 0, %s20
      %s32 = sphi 0, %s34
      %s35 = sphi 0, %s32
      %s36 = sphi 0, %s35
      %s52 = sphi 0, %s36
      %s56 = sphi 0, %s56
      %s58 = sphi 0, %s56
      %s59 = sphi 0, %s58
      %s73 = sphi 0, %s59
      %s77 = sphi 0, %s77
      %s79 = sphi 0, %s77
      %s80 = sphi 0, %s79
      %s94 = sphi 0, %s80
      %s98 = sphi 0, %s98
      %s100 = sphi 0, %s98
      %s101 = sphi 0, %s100
      %s115 = sphi 0, %s101
    $region4: #{tpu_custom_call.1} parent=1 // loop_header_branch
      %13 = sbr.rel (%p11) target = $region8
    $region5: #{tpu_custom_call.1} parent=1 // loop_body
      %s15 = ssub.s32 %s10, 1
      %s16 = ssub.s32 %s10, 2
      %s23 = sadd.s32 1, %s18
      %p24 = scmp.ge.s32.totalorder %s23, 2
      %s25 = scalar_select %p24, 0, %s23
      %s26 = sadd.s32 1, %s17
      %s27 = scalar_select %p24, %s26, %s17
      %p28 = scmp.ge.s32.totalorder %s27, 2
      %s29 = scalar_select %p28, 0, %s27
      %s30 = ssub.s32 %s18, %s25
      %p31 = scmp.eq.s32.totalorder %s30, 0
      %s33 = sadd.s32 %s32, 1
      %s34 = scalar_select %p31, %s32, %s33
      %p37 = pneg %p31
      %p38 = scmp.eq.s32.totalorder %s10, 3
      %p39 = por %p37, %p38
      %p40 = scmp.ne.s32.totalorder %s32, %s35
      %p41 = scmp.eq.s32.totalorder %s10, 0
      %p42 = por %p40, %p41
      %p43 = scmp.ne.s32.totalorder %s32, %s35
      %p44 = scmp.eq.s32.totalorder %s15, 3
      %p45 = por %p43, %p44
      %p46 = scmp.ne.s32.totalorder %s35, %s36
      %p47 = scmp.eq.s32.totalorder %s15, 0
      %p48 = por %p46, %p47
      %p49 = scmp.ne.s32.totalorder %s35, %s36
      %p50 = scmp.eq.s32.totalorder %s16, 3
      %p51 = por %p49, %p50
      %p53 = scmp.ne.s32.totalorder %s36, %s52
      %p54 = scmp.eq.s32.totalorder %s16, 0
      %p55 = por %p53, %p54
      %s57 = sadd.s32 %s56, 1
      %p60 = scmp.eq.s32.totalorder %s10, 3
      %p61 = scmp.ne.s32.totalorder %s56, %s58
      %p62 = scmp.eq.s32.totalorder %s10, 0
      %p63 = por %p61, %p62
      %p64 = scmp.ne.s32.totalorder %s56, %s58
      %p65 = scmp.eq.s32.totalorder %s15, 3
      %p66 = por %p64, %p65
      %p67 = scmp.ne.s32.totalorder %s58, %s59
      %p68 = scmp.eq.s32.totalorder %s15, 0
      %p69 = por %p67, %p68
      %p70 = scmp.ne.s32.totalorder %s58, %s59
      %p71 = scmp.eq.s32.totalorder %s16, 3
      %p72 = por %p70, %p71
      %p74 = scmp.ne.s32.totalorder %s59, %s73
      %p75 = scmp.eq.s32.totalorder %s16, 0
      %p76 = por %p74, %p75
      %s78 = sadd.s32 %s77, 1
      %p81 = scmp.eq.s32.totalorder %s10, 3
      %p82 = scmp.ne.s32.totalorder %s77, %s79
      %p83 = scmp.eq.s32.totalorder %s10, 0
      %p84 = por %p82, %p83
      %p85 = scmp.ne.s32.totalorder %s77, %s79
      %p86 = scmp.eq.s32.totalorder %s15, 3
      %p87 = por %p85, %p86
      %p88 = scmp.ne.s32.totalorder %s79, %s80
      %p89 = scmp.eq.s32.totalorder %s15, 0
      %p90 = por %p88, %p89
      %p91 = scmp.ne.s32.totalorder %s79, %s80
      %p92 = scmp.eq.s32.totalorder %s16, 3
      %p93 = por %p91, %p92
      %p95 = scmp.ne.s32.totalorder %s80, %s94
      %p96 = scmp.eq.s32.totalorder %s16, 0
      %p97 = por %p95, %p96
      %s99 = sadd.s32 %s98, 1
      %p102 = scmp.eq.s32.totalorder %s10, 3
      %p103 = scmp.ne.s32.totalorder %s98, %s100
      %p104 = scmp.eq.s32.totalorder %s10, 0
      %p105 = por %p103, %p104
      %p106 = scmp.ne.s32.totalorder %s98, %s100
      %p107 = scmp.eq.s32.totalorder %s15, 3
      %p108 = por %p106, %p107
      %p109 = scmp.ne.s32.totalorder %s100, %s101
      %p110 = scmp.eq.s32.totalorder %s15, 0
      %p111 = por %p109, %p110
      %p112 = scmp.ne.s32.totalorder %s100, %s101
      %p113 = scmp.eq.s32.totalorder %s16, 3
      %p114 = por %p112, %p113
      %p116 = scmp.ne.s32.totalorder %s101, %s115
      %p117 = scmp.eq.s32.totalorder %s16, 0
      %p118 = por %p116, %p117
      %p119 = scmp.le.s32.totalorder 1, %s10
      %p120 = scmp.lt.s32.totalorder %s10, 5
      %p121 = pnand %p119, %p120
      %p122 = pneg %p121
      // Predicated region
      $region9: #{tpu_custom_call.1} parent=5 // pred_check
        _
      $region10: #{tpu_custom_call.1} parent=5 // pred_check_branch
        %124 = sbr.rel (%p121) target = $region12
      $region11: #{tpu_custom_call.1} parent=5 // pred_region
        %s125 = ssub.s32 %s10, 1
        // Predicated region
        $region13: #{tpu_custom_call.1} parent=11 // pred_check
          %p126 = pneg %p69
        $region14: #{tpu_custom_call.1} parent=11 // pred_check_branch
          %128 = sbr.rel (%p126) target = $region16
        $region15: #{tpu_custom_call.1} parent=11 // pred_region
          _
        $region16: #{tpu_custom_call.1} parent=11 // pred_fallthru
          _
        // Predicated region
        $region17: #{tpu_custom_call.1} parent=11 // pred_check
          %p129 = pneg %p90
        $region18: #{tpu_custom_call.1} parent=11 // pred_check_branch
          %131 = sbr.rel (%p129) target = $region20
        $region19: #{tpu_custom_call.1} parent=11 // pred_region
          _
        $region20: #{tpu_custom_call.1} parent=11 // pred_fallthru
          _
      $region12: #{tpu_custom_call.1} parent=5 // pred_fallthru
        _
      %p132 = scmp.lt.s32.totalorder %s10, 4
      // Predicated region
      $region21: #{tpu_custom_call.1} parent=5 // pred_check
        %p133 = pneg %p132
      $region22: #{tpu_custom_call.1} parent=5 // pred_check_branch
        %135 = sbr.rel (%p133) target = $region24
      $region23: #{tpu_custom_call.1} parent=5 // pred_region
        // Predicated region
        $region25: #{tpu_custom_call.1} parent=23 // pred_check
          %p136 = pneg %p42
        $region26: #{tpu_custom_call.1} parent=23 // pred_check_branch
          %138 = sbr.rel (%p136) target = $region28
        $region27: #{tpu_custom_call.1} parent=23 // pred_region
          %s139 = sand.u32 %s32, 1
          %s140 = sand.u32 %s32, 1
          %s141 = smul.addr %s140, 256
          %s142 = scalar_lea.vmem [#allocation8], %s141
          %s143 = smul.u32 16, %s18
          %s144 = smul.addr %s143, 8
          %s145 = scalar_lea.vmem %s0, %s144
          // Predicated region
          $region29: #{tpu_custom_call.1} parent=27 // pred_check
            _
          $region30: #{tpu_custom_call.1} parent=27 // pred_check_branch
            %147 = sbr.rel (0) target = $region32
          $region31: #{tpu_custom_call.1} parent=27 // pred_region
            // Predicated region
            $region33: #{tpu_custom_call.1} parent=31 // pred_check
              _
            $region34: #{tpu_custom_call.1} parent=31 // pred_check_branch
              %149 = sbr.rel (0) target = $region36
            $region35: #{tpu_custom_call.1} parent=31 // pred_region
              // Predicated region
              $region48: #{tpu_custom_call.1} parent=35 // pred_check
                _
              $region49: #{tpu_custom_call.1} parent=35 // pred_check_branch
                %226 = sbr.rel (0) target = $region51
              $region50: #{tpu_custom_call.1} parent=35 // pred_region
                loop: start=0, step=1, limit=1
                $region52: #{tpu_custom_call.1} parent=50 // loop_pre_header
                  _
                $region53: #{tpu_custom_call.1} parent=50 // loop_header
                  %s228 = sphi 0, %s232
                  %p229 = scmp.ge.s32.totalorder %s228, 1
                  %s233 = sphi %s145, %s145
                  %s234 = sphi %s142, %s142
                $region54: #{tpu_custom_call.1} parent=50 // loop_header_branch
                  %231 = sbr.rel (%p229) target = $region58
                $region55: #{tpu_custom_call.1} parent=50 // loop_body
                  %v235 = vld [vmem:[%s233] sm:$0xff]
                  %236 = vst [vmem:[%s234] sm:$0xff] %v235
                  %v237 = vld [vmem:[%s233 + $0x8] sm:$0xff]
                  %238 = vst [vmem:[%s234 + $0x8] sm:$0xff] %v237
                  %v239 = vld [vmem:[%s233 + $0x10] sm:$0xff]
                  %240 = vst [vmem:[%s234 + $0x10] sm:$0xff] %v239
                  %v241 = vld [vmem:[%s233 + $0x18] sm:$0xff]
                  %242 = vst [vmem:[%s234 + $0x18] sm:$0xff] %v241
                  %v243 = vld [vmem:[%s233 + $0x20] sm:$0xff]
                  %244 = vst [vmem:[%s234 + $0x20] sm:$0xff] %v243
                  %v245 = vld [vmem:[%s233 + $0x28] sm:$0xff]
                  %246 = vst [vmem:[%s234 + $0x28] sm:$0xff] %v245
                  %v247 = vld [vmem:[%s233 + $0x30] sm:$0xff]
                  %248 = vst [vmem:[%s234 + $0x30] sm:$0xff] %v247
                  %v249 = vld [vmem:[%s233 + $0x38] sm:$0xff]
                  %250 = vst [vmem:[%s234 + $0x38] sm:$0xff] %v249
                  %v251 = vld [vmem:[%s233 + $0x40] sm:$0xff]
                  %252 = vst [vmem:[%s234 + $0x40] sm:$0xff] %v251
                  %v253 = vld [vmem:[%s233 + $0x48] sm:$0xff]
                  %254 = vst [vmem:[%s234 + $0x48] sm:$0xff] %v253
                  %v255 = vld [vmem:[%s233 + $0x50] sm:$0xff]
                  %256 = vst [vmem:[%s234 + $0x50] sm:$0xff] %v255
                  %v257 = vld [vmem:[%s233 + $0x58] sm:$0xff]
                  %258 = vst [vmem:[%s234 + $0x58] sm:$0xff] %v257
                  %v259 = vld [vmem:[%s233 + $0x60] sm:$0xff]
                  %260 = vst [vmem:[%s234 + $0x60] sm:$0xff] %v259
                  %v261 = vld [vmem:[%s233 + $0x68] sm:$0xff]
                  %262 = vst [vmem:[%s234 + $0x68] sm:$0xff] %v261
                  %v263 = vld [vmem:[%s233 + $0x70] sm:$0xff]
                  %264 = vst [vmem:[%s234 + $0x70] sm:$0xff] %v263
                  %v265 = vld [vmem:[%s233 + $0x78] sm:$0xff]
                  %266 = vst [vmem:[%s234 + $0x78] sm:$0xff] %v265
                  %v267 = vld [vmem:[%s233 + $0x100] sm:$0xff]
                  %268 = vst [vmem:[%s234 + $0x80] sm:$0xff] %v267
                  %v269 = vld [vmem:[%s233 + $0x108] sm:$0xff]
                  %270 = vst [vmem:[%s234 + $0x88] sm:$0xff] %v269
                  %v271 = vld [vmem:[%s233 + $0x110] sm:$0xff]
                  %272 = vst [vmem:[%s234 + $0x90] sm:$0xff] %v271
                  %v273 = vld [vmem:[%s233 + $0x118] sm:$0xff]
                  %274 = vst [vmem:[%s234 + $0x98] sm:$0xff] %v273
                  %v275 = vld [vmem:[%s233 + $0x120] sm:$0xff]
                  %276 = vst [vmem:[%s234 + $0xa0] sm:$0xff] %v275
                  %v277 = vld [vmem:[%s233 + $0x128] sm:$0xff]
                  %278 = vst [vmem:[%s234 + $0xa8] sm:$0xff] %v277
                  %v279 = vld [vmem:[%s233 + $0x130] sm:$0xff]
                  %280 = vst [vmem:[%s234 + $0xb0] sm:$0xff] %v279
                  %v281 = vld [vmem:[%s233 + $0x138] sm:$0xff]
                  %282 = vst [vmem:[%s234 + $0xb8] sm:$0xff] %v281
                  %v283 = vld [vmem:[%s233 + $0x140] sm:$0xff]
                  %284 = vst [vmem:[%s234 + $0xc0] sm:$0xff] %v283
                  %v285 = vld [vmem:[%s233 + $0x148] sm:$0xff]
                  %286 = vst [vmem:[%s234 + $0xc8] sm:$0xff] %v285
                  %v287 = vld [vmem:[%s233 + $0x150] sm:$0xff]
                  %288 = vst [vmem:[%s234 + $0xd0] sm:$0xff] %v287
                  %v289 = vld [vmem:[%s233 + $0x158] sm:$0xff]
                  %290 = vst [vmem:[%s234 + $0xd8] sm:$0xff] %v289
                  %v291 = vld [vmem:[%s233 + $0x160] sm:$0xff]
                  %292 = vst [vmem:[%s234 + $0xe0] sm:$0xff] %v291
                  %v293 = vld [vmem:[%s233 + $0x168] sm:$0xff]
                  %294 = vst [vmem:[%s234 + $0xe8] sm:$0xff] %v293
                  %v295 = vld [vmem:[%s233 + $0x170] sm:$0xff]
                  %296 = vst [vmem:[%s234 + $0xf0] sm:$0xff] %v295
                  %v297 = vld [vmem:[%s233 + $0x178] sm:$0xff]
                  %298 = vst [vmem:[%s234 + $0xf8] sm:$0xff] %v297
                $region56: #{tpu_custom_call.1} parent=50 // loop_footer
                  %s232 = sadd.s32 1, %s228
                $region57: #{tpu_custom_call.1} parent=50 // loop_footer_branch
                  %227 = sbr.rel target = $region53
                $region58: #{tpu_custom_call.1} parent=50 // loop_exit
                  _
              $region51: #{tpu_custom_call.1} parent=35 // pred_fallthru
                _
              // Predicated region
              $region59: #{tpu_custom_call.1} parent=35 // pred_check
                _
              $region60: #{tpu_custom_call.1} parent=35 // pred_check_branch
                %300 = sbr.rel target = $region62
              $region61: #{tpu_custom_call.1} parent=35 // pred_region
                _
              $region62: #{tpu_custom_call.1} parent=35 // pred_fallthru
                _
            $region36: #{tpu_custom_call.1} parent=31 // pred_fallthru
              _
            // Predicated region
            $region37: #{tpu_custom_call.1} parent=31 // pred_check
              _
            $region38: #{tpu_custom_call.1} parent=31 // pred_check_branch
              %151 = sbr.rel target = $region40
            $region39: #{tpu_custom_call.1} parent=31 // pred_region
              loop: start=0, step=1, limit=1
              $region41: #{tpu_custom_call.1} parent=39 // loop_pre_header
                _
              $region42: #{tpu_custom_call.1} parent=39 // loop_header
                %s154 = sphi 0, %s158
                %p155 = scmp.ge.s32.totalorder %s154, 1
                %s159 = sphi %s145, %s145
                %s160 = sphi %s142, %s142
              $region43: #{tpu_custom_call.1} parent=39 // loop_header_branch
                %157 = sbr.rel (%p155) target = $region47
              $region44: #{tpu_custom_call.1} parent=39 // loop_body
                %v161 = vld [vmem:[%s159] sm:$0xff]
                %162 = vst [vmem:[%s160] sm:$0xff] %v161
                %v163 = vld [vmem:[%s159 + $0x8] sm:$0xff]
                %164 = vst [vmem:[%s160 + $0x8] sm:$0xff] %v163
                %v165 = vld [vmem:[%s159 + $0x10] sm:$0xff]
                %166 = vst [vmem:[%s160 + $0x10] sm:$0xff] %v165
                %v167 = vld [vmem:[%s159 + $0x18] sm:$0xff]
                %168 = vst [vmem:[%s160 + $0x18] sm:$0xff] %v167
                %v169 = vld [vmem:[%s159 + $0x20] sm:$0xff]
                %170 = vst [vmem:[%s160 + $0x20] sm:$0xff] %v169
                %v171 = vld [vmem:[%s159 + $0x28] sm:$0xff]
                %172 = vst [vmem:[%s160 + $0x28] sm:$0xff] %v171
                %v173 = vld [vmem:[%s159 + $0x30] sm:$0xff]
                %174 = vst [vmem:[%s160 + $0x30] sm:$0xff] %v173
                %v175 = vld [vmem:[%s159 + $0x38] sm:$0xff]
                %176 = vst [vmem:[%s160 + $0x38] sm:$0xff] %v175
                %v177 = vld [vmem:[%s159 + $0x40] sm:$0xff]
                %178 = vst [vmem:[%s160 + $0x40] sm:$0xff] %v177
                %v179 = vld [vmem:[%s159 + $0x48] sm:$0xff]
                %180 = vst [vmem:[%s160 + $0x48] sm:$0xff] %v179
                %v181 = vld [vmem:[%s159 + $0x50] sm:$0xff]
                %182 = vst [vmem:[%s160 + $0x50] sm:$0xff] %v181
                %v183 = vld [vmem:[%s159 + $0x58] sm:$0xff]
                %184 = vst [vmem:[%s160 + $0x58] sm:$0xff] %v183
                %v185 = vld [vmem:[%s159 + $0x60] sm:$0xff]
                %186 = vst [vmem:[%s160 + $0x60] sm:$0xff] %v185
                %v187 = vld [vmem:[%s159 + $0x68] sm:$0xff]
                %188 = vst [vmem:[%s160 + $0x68] sm:$0xff] %v187
                %v189 = vld [vmem:[%s159 + $0x70] sm:$0xff]
                %190 = vst [vmem:[%s160 + $0x70] sm:$0xff] %v189
                %v191 = vld [vmem:[%s159 + $0x78] sm:$0xff]
                %192 = vst [vmem:[%s160 + $0x78] sm:$0xff] %v191
                %v193 = vld [vmem:[%s159 + $0x100] sm:$0xff]
                %194 = vst [vmem:[%s160 + $0x80] sm:$0xff] %v193
                %v195 = vld [vmem:[%s159 + $0x108] sm:$0xff]
                %196 = vst [vmem:[%s160 + $0x88] sm:$0xff] %v195
                %v197 = vld [vmem:[%s159 + $0x110] sm:$0xff]
                %198 = vst [vmem:[%s160 + $0x90] sm:$0xff] %v197
                %v199 = vld [vmem:[%s159 + $0x118] sm:$0xff]
                %200 = vst [vmem:[%s160 + $0x98] sm:$0xff] %v199
                %v201 = vld [vmem:[%s159 + $0x120] sm:$0xff]
                %202 = vst [vmem:[%s160 + $0xa0] sm:$0xff] %v201
                %v203 = vld [vmem:[%s159 + $0x128] sm:$0xff]
                %204 = vst [vmem:[%s160 + $0xa8] sm:$0xff] %v203
                %v205 = vld [vmem:[%s159 + $0x130] sm:$0xff]
                %206 = vst [vmem:[%s160 + $0xb0] sm:$0xff] %v205
                %v207 = vld [vmem:[%s159 + $0x138] sm:$0xff]
                %208 = vst [vmem:[%s160 + $0xb8] sm:$0xff] %v207
                %v209 = vld [vmem:[%s159 + $0x140] sm:$0xff]
                %210 = vst [vmem:[%s160 + $0xc0] sm:$0xff] %v209
                %v211 = vld [vmem:[%s159 + $0x148] sm:$0xff]
                %212 = vst [vmem:[%s160 + $0xc8] sm:$0xff] %v211
                %v213 = vld [vmem:[%s159 + $0x150] sm:$0xff]
                %214 = vst [vmem:[%s160 + $0xd0] sm:$0xff] %v213
                %v215 = vld [vmem:[%s159 + $0x158] sm:$0xff]
                %216 = vst [vmem:[%s160 + $0xd8] sm:$0xff] %v215
                %v217 = vld [vmem:[%s159 + $0x160] sm:$0xff]
                %218 = vst [vmem:[%s160 + $0xe0] sm:$0xff] %v217
                %v219 = vld [vmem:[%s159 + $0x168] sm:$0xff]
                %220 = vst [vmem:[%s160 + $0xe8] sm:$0xff] %v219
                %v221 = vld [vmem:[%s159 + $0x170] sm:$0xff]
                %222 = vst [vmem:[%s160 + $0xf0] sm:$0xff] %v221
                %v223 = vld [vmem:[%s159 + $0x178] sm:$0xff]
                %224 = vst [vmem:[%s160 + $0xf8] sm:$0xff] %v223
              $region45: #{tpu_custom_call.1} parent=39 // loop_footer
                %s158 = sadd.s32 1, %s154
              $region46: #{tpu_custom_call.1} parent=39 // loop_footer_branch
                %153 = sbr.rel target = $region42
              $region47: #{tpu_custom_call.1} parent=39 // loop_exit
                _
            $region40: #{tpu_custom_call.1} parent=31 // pred_fallthru
              _
          $region32: #{tpu_custom_call.1} parent=27 // pred_fallthru
            _
          %301 = vnop
        $region28: #{tpu_custom_call.1} parent=23 // pred_fallthru
          _
      $region24: #{tpu_custom_call.1} parent=5 // pred_fallthru
        _
      %p302 = scmp.le.s32.totalorder 1, %s10
      %p303 = scmp.lt.s32.totalorder %s10, 5
      %p304 = pnand %p302, %p303
      %p305 = pneg %p304
      // Predicated region
      $region63: #{tpu_custom_call.1} parent=5 // pred_check
        _
      $region64: #{tpu_custom_call.1} parent=5 // pred_check_branch
        %307 = sbr.rel (%p304) target = $region66
      $region65: #{tpu_custom_call.1} parent=5 // pred_region
        %s308 = ssub.s32 %s10, 1
        %s309 = sand.u32 %s35, 1
        %s310 = sand.u32 %s35, 1
        %s311 = smul.addr %s310, 256
        %s312 = scalar_lea.vmem [#allocation8], %s311
        // Predicated region
        $region67: #{tpu_custom_call.1} parent=65 // pred_check
          %p313 = pneg %p48
        $region68: #{tpu_custom_call.1} parent=65 // pred_check_branch
          %315 = sbr.rel (%p313) target = $region70
        $region69: #{tpu_custom_call.1} parent=65 // pred_region
          _
        $region70: #{tpu_custom_call.1} parent=65 // pred_fallthru
          _
        %s316 = sand.u32 %s35, 1
        %s317 = sand.u32 %s35, 1
        %s318 = smul.addr %s317, 256
        %s319 = scalar_lea.vmem [#allocation8], %s318
        %p320 = pneg %p48
        %p321 = pneg %p45
        %p322 = pneg %p69
        %p323 = pneg %p66
        %p324 = pneg %p90
        %p325 = pneg %p87
        %p326 = pneg %p111
        %p327 = pneg %p108
        %s328 = smul.u32 16, %s20
        %v329 = vld [vmem:[%s312] sm:$0xff]
        %v330 = vld [vmem:[%s312 + $0x8] sm:$0xff]
        %v331 = vld [vmem:[%s312 + $0x10] sm:$0xff]
        %v332 = vld [vmem:[%s312 + $0x18] sm:$0xff]
        %v333 = vld [vmem:[%s312 + $0x20] sm:$0xff]
        %v334 = vld [vmem:[%s312 + $0x28] sm:$0xff]
        %v335 = vld [vmem:[%s312 + $0x30] sm:$0xff]
        %v336 = vld [vmem:[%s312 + $0x38] sm:$0xff]
        %v337 = vld [vmem:[%s312 + $0x40] sm:$0xff]
        %v338 = vld [vmem:[%s312 + $0x48] sm:$0xff]
        %v339 = vld [vmem:[%s312 + $0x50] sm:$0xff]
        %v340 = vld [vmem:[%s312 + $0x58] sm:$0xff]
        %v341 = vld [vmem:[%s312 + $0x60] sm:$0xff]
        %v342 = vld [vmem:[%s312 + $0x68] sm:$0xff]
        %v343 = vld [vmem:[%s312 + $0x70] sm:$0xff]
        %v344 = vld [vmem:[%s312 + $0x78] sm:$0xff]
        %v345 = vld [vmem:[%s312 + $0x80] sm:$0xff]
        %v346 = vld [vmem:[%s312 + $0x88] sm:$0xff]
        %v347 = vld [vmem:[%s312 + $0x90] sm:$0xff]
        %v348 = vld [vmem:[%s312 + $0x98] sm:$0xff]
        %v349 = vld [vmem:[%s312 + $0xa0] sm:$0xff]
        %v350 = vld [vmem:[%s312 + $0xa8] sm:$0xff]
        %v351 = vld [vmem:[%s312 + $0xb0] sm:$0xff]
        %v352 = vld [vmem:[%s312 + $0xb8] sm:$0xff]
        %v353 = vld [vmem:[%s312 + $0xc0] sm:$0xff]
        %v354 = vld [vmem:[%s312 + $0xc8] sm:$0xff]
        %v355 = vld [vmem:[%s312 + $0xd0] sm:$0xff]
        %v356 = vld [vmem:[%s312 + $0xd8] sm:$0xff]
        %v357 = vld [vmem:[%s312 + $0xe0] sm:$0xff]
        %v358 = vld [vmem:[%s312 + $0xe8] sm:$0xff]
        %v359 = vld [vmem:[%s312 + $0xf0] sm:$0xff]
        %v360 = vld [vmem:[%s312 + $0xf8] sm:$0xff]
        %v361 = vld [vmem:[%s1] sm:$0xff]
        %363 = vset.pattern.permute.xlu0 0
        %364 = vperm.xlu0 %363, %v329
        %v365 = vpop.permute.xlu0 %364
        %368 = vset.pattern.permute.xlu0 0
        %369 = vperm.xlu0 %368, %v330
        %v370 = vpop.permute.xlu0 %369
        %373 = vset.pattern.permute.xlu0 0
        %374 = vperm.xlu0 %373, %v331
        %v375 = vpop.permute.xlu0 %374
        %378 = vset.pattern.permute.xlu0 0
        %379 = vperm.xlu0 %378, %v332
        %v380 = vpop.permute.xlu0 %379
        %383 = vset.pattern.permute.xlu0 0
        %384 = vperm.xlu0 %383, %v333
        %v385 = vpop.permute.xlu0 %384
        %388 = vset.pattern.permute.xlu0 0
        %389 = vperm.xlu0 %388, %v334
        %v390 = vpop.permute.xlu0 %389
        %393 = vset.pattern.permute.xlu0 0
        %394 = vperm.xlu0 %393, %v335
        %v395 = vpop.permute.xlu0 %394
        %398 = vset.pattern.permute.xlu0 0
        %399 = vperm.xlu0 %398, %v336
        %v400 = vpop.permute.xlu0 %399
        %403 = vset.pattern.permute.xlu0 0
        %404 = vperm.xlu0 %403, %v337
        %v405 = vpop.permute.xlu0 %404
        %408 = vset.pattern.permute.xlu0 0
        %409 = vperm.xlu0 %408, %v338
        %v410 = vpop.permute.xlu0 %409
        %413 = vset.pattern.permute.xlu0 0
        %414 = vperm.xlu0 %413, %v339
        %v415 = vpop.permute.xlu0 %414
        %418 = vset.pattern.permute.xlu0 0
        %419 = vperm.xlu0 %418, %v340
        %v420 = vpop.permute.xlu0 %419
        %423 = vset.pattern.permute.xlu0 0
        %424 = vperm.xlu0 %423, %v341
        %v425 = vpop.permute.xlu0 %424
        %428 = vset.pattern.permute.xlu0 0
        %429 = vperm.xlu0 %428, %v342
        %v430 = vpop.permute.xlu0 %429
        %433 = vset.pattern.permute.xlu0 0
        %434 = vperm.xlu0 %433, %v343
        %v435 = vpop.permute.xlu0 %434
        %438 = vset.pattern.permute.xlu0 0
        %439 = vperm.xlu0 %438, %v344
        %v440 = vpop.permute.xlu0 %439
        %443 = vset.pattern.permute.xlu0 0
        %444 = vperm.xlu0 %443, %v345
        %v445 = vpop.permute.xlu0 %444
        %448 = vset.pattern.permute.xlu0 0
        %449 = vperm.xlu0 %448, %v346
        %v450 = vpop.permute.xlu0 %449
        %453 = vset.pattern.permute.xlu0 0
        %454 = vperm.xlu0 %453, %v347
        %v455 = vpop.permute.xlu0 %454
        %458 = vset.pattern.permute.xlu0 0
        %459 = vperm.xlu0 %458, %v348
        %v460 = vpop.permute.xlu0 %459
        %463 = vset.pattern.permute.xlu0 0
        %464 = vperm.xlu0 %463, %v349
        %v465 = vpop.permute.xlu0 %464
        %468 = vset.pattern.permute.xlu0 0
        %469 = vperm.xlu0 %468, %v350
        %v470 = vpop.permute.xlu0 %469
        %473 = vset.pattern.permute.xlu0 0
        %474 = vperm.xlu0 %473, %v351
        %v475 = vpop.permute.xlu0 %474
        %478 = vset.pattern.permute.xlu0 0
        %479 = vperm.xlu0 %478, %v352
        %v480 = vpop.permute.xlu0 %479
        %483 = vset.pattern.permute.xlu0 0
        %484 = vperm.xlu0 %483, %v353
        %v485 = vpop.permute.xlu0 %484
        %488 = vset.pattern.permute.xlu0 0
        %489 = vperm.xlu0 %488, %v354
        %v490 = vpop.permute.xlu0 %489
        %493 = vset.pattern.permute.xlu0 0
        %494 = vperm.xlu0 %493, %v355
        %v495 = vpop.permute.xlu0 %494
        %498 = vset.pattern.permute.xlu0 0
        %499 = vperm.xlu0 %498, %v356
        %v500 = vpop.permute.xlu0 %499
        %503 = vset.pattern.permute.xlu0 0
        %504 = vperm.xlu0 %503, %v357
        %v505 = vpop.permute.xlu0 %504
        %508 = vset.pattern.permute.xlu0 0
        %509 = vperm.xlu0 %508, %v358
        %v510 = vpop.permute.xlu0 %509
        %513 = vset.pattern.permute.xlu0 0
        %514 = vperm.xlu0 %513, %v359
        %v515 = vpop.permute.xlu0 %514
        %518 = vset.pattern.permute.xlu0 0
        %519 = vperm.xlu0 %518, %v360
        %v520 = vpop.permute.xlu0 %519
        %v523 = vlaneseq
        %v524 = vshrl.u32 %v523, 7
        %v525 = vsub.s32 0, %v524
        %v526 = vrot.slane %v361, %v525
        %v527 = vlaneseq
        %v528 = vshrl.u32 %v527, 7
        %v529 = vsub.s32 4, %v528
        %v530 = vrot.slane %v361, %v529
        %v533 = vlaneseq
        %v534 = vshrl.u32 %v533, 7
        %v535 = vsub.s32 0, %v534
        %v536 = vrot.slane %v526, %v535
        %v537 = vlaneseq
        %v538 = vshrl.u32 %v537, 7
        %v539 = vsub.s32 0, %v538
        %v540 = vrot.slane %v530, %v539
        %v541 = vmul.f32 %v365, %v536
        %v542 = vmul.f32 %v365, %v540
        %v543 = vmul.f32 %v370, %v536
        %v544 = vmul.f32 %v370, %v540
        %v545 = vmul.f32 %v375, %v536
        %v546 = vmul.f32 %v375, %v540
        %v547 = vmul.f32 %v380, %v536
        %v548 = vmul.f32 %v380, %v540
        %v549 = vmul.f32 %v385, %v536
        %v550 = vmul.f32 %v385, %v540
        %v551 = vmul.f32 %v390, %v536
        %v552 = vmul.f32 %v390, %v540
        %v553 = vmul.f32 %v395, %v536
        %v554 = vmul.f32 %v395, %v540
        %v555 = vmul.f32 %v400, %v536
        %v556 = vmul.f32 %v400, %v540
        %v557 = vmul.f32 %v405, %v536
        %v558 = vmul.f32 %v405, %v540
        %v559 = vmul.f32 %v410, %v536
        %v560 = vmul.f32 %v410, %v540
        %v561 = vmul.f32 %v415, %v536
        %v562 = vmul.f32 %v415, %v540
        %v563 = vmul.f32 %v420, %v536
        %v564 = vmul.f32 %v420, %v540
        %v565 = vmul.f32 %v425, %v536
        %v566 = vmul.f32 %v425, %v540
        %v567 = vmul.f32 %v430, %v536
        %v568 = vmul.f32 %v430, %v540
        %v569 = vmul.f32 %v435, %v536
        %v570 = vmul.f32 %v435, %v540
        %v571 = vmul.f32 %v440, %v536
        %v572 = vmul.f32 %v440, %v540
        %v573 = vmul.f32 %v445, %v536
        %v574 = vmul.f32 %v445, %v540
        %v575 = vmul.f32 %v450, %v536
        %v576 = vmul.f32 %v450, %v540
        %v577 = vmul.f32 %v455, %v536
        %v578 = vmul.f32 %v455, %v540
        %v579 = vmul.f32 %v460, %v536
        %v580 = vmul.f32 %v460, %v540
        %v581 = vmul.f32 %v465, %v536
        %v582 = vmul.f32 %v465, %v540
        %v583 = vmul.f32 %v470, %v536
        %v584 = vmul.f32 %v470, %v540
        %v585 = vmul.f32 %v475, %v536
        %v586 = vmul.f32 %v475, %v540
        %v587 = vmul.f32 %v480, %v536
        %v588 = vmul.f32 %v480, %v540
        %v589 = vmul.f32 %v485, %v536
        %v590 = vmul.f32 %v485, %v540
        %v591 = vmul.f32 %v490, %v536
        %v592 = vmul.f32 %v490, %v540
        %v593 = vmul.f32 %v495, %v536
        %v594 = vmul.f32 %v495, %v540
        %v595 = vmul.f32 %v500, %v536
        %v596 = vmul.f32 %v500, %v540
        %v597 = vmul.f32 %v505, %v536
        %v598 = vmul.f32 %v505, %v540
        %v599 = vmul.f32 %v510, %v536
        %v600 = vmul.f32 %v510, %v540
        %v601 = vmul.f32 %v515, %v536
        %v602 = vmul.f32 %v515, %v540
        %v603 = vmul.f32 %v520, %v536
        %v604 = vmul.f32 %v520, %v540
        %605 = vset.pattern.permute.xlu0 1
        %606 = vperm.xlu0 %605, %v329
        %v607 = vpop.permute.xlu0 %606
        %609 = vset.pattern.permute.xlu0 1
        %610 = vperm.xlu0 %609, %v330
        %v611 = vpop.permute.xlu0 %610
        %613 = vset.pattern.permute.xlu0 1
        %614 = vperm.xlu0 %613, %v331
        %v615 = vpop.permute.xlu0 %614
        %617 = vset.pattern.permute.xlu0 1
        %618 = vperm.xlu0 %617, %v332
        %v619 = vpop.permute.xlu0 %618
        %621 = vset.pattern.permute.xlu0 1
        %622 = vperm.xlu0 %621, %v333
        %v623 = vpop.permute.xlu0 %622
        %625 = vset.pattern.permute.xlu0 1
        %626 = vperm.xlu0 %625, %v334
        %v627 = vpop.permute.xlu0 %626
        %629 = vset.pattern.permute.xlu0 1
        %630 = vperm.xlu0 %629, %v335
        %v631 = vpop.permute.xlu0 %630
        %633 = vset.pattern.permute.xlu0 1
        %634 = vperm.xlu0 %633, %v336
        %v635 = vpop.permute.xlu0 %634
        %637 = vset.pattern.permute.xlu0 1
        %638 = vperm.xlu0 %637, %v337
        %v639 = vpop.permute.xlu0 %638
        %641 = vset.pattern.permute.xlu0 1
        %642 = vperm.xlu0 %641, %v338
        %v643 = vpop.permute.xlu0 %642
        %645 = vset.pattern.permute.xlu0 1
        %646 = vperm.xlu0 %645, %v339
        %v647 = vpop.permute.xlu0 %646
        %649 = vset.pattern.permute.xlu0 1
        %650 = vperm.xlu0 %649, %v340
        %v651 = vpop.permute.xlu0 %650
        %653 = vset.pattern.permute.xlu0 1
        %654 = vperm.xlu0 %653, %v341
        %v655 = vpop.permute.xlu0 %654
        %657 = vset.pattern.permute.xlu0 1
        %658 = vperm.xlu0 %657, %v342
        %v659 = vpop.permute.xlu0 %658
        %661 = vset.pattern.permute.xlu0 1
        %662 = vperm.xlu0 %661, %v343
        %v663 = vpop.permute.xlu0 %662
        %665 = vset.pattern.permute.xlu0 1
        %666 = vperm.xlu0 %665, %v344
        %v667 = vpop.permute.xlu0 %666
        %669 = vset.pattern.permute.xlu0 1
        %670 = vperm.xlu0 %669, %v345
        %v671 = vpop.permute.xlu0 %670
        %673 = vset.pattern.permute.xlu0 1
        %674 = vperm.xlu0 %673, %v346
        %v675 = vpop.permute.xlu0 %674
        %677 = vset.pattern.permute.xlu0 1
        %678 = vperm.xlu0 %677, %v347
        %v679 = vpop.permute.xlu0 %678
        %681 = vset.pattern.permute.xlu0 1
        %682 = vperm.xlu0 %681, %v348
        %v683 = vpop.permute.xlu0 %682
        %685 = vset.pattern.permute.xlu0 1
        %686 = vperm.xlu0 %685, %v349
        %v687 = vpop.permute.xlu0 %686
        %689 = vset.pattern.permute.xlu0 1
        %690 = vperm.xlu0 %689, %v350
        %v691 = vpop.permute.xlu0 %690
        %693 = vset.pattern.permute.xlu0 1
        %694 = vperm.xlu0 %693, %v351
        %v695 = vpop.permute.xlu0 %694
        %697 = vset.pattern.permute.xlu0 1
        %698 = vperm.xlu0 %697, %v352
        %v699 = vpop.permute.xlu0 %698
        %701 = vset.pattern.permute.xlu0 1
        %702 = vperm.xlu0 %701, %v353
        %v703 = vpop.permute.xlu0 %702
        %705 = vset.pattern.permute.xlu0 1
        %706 = vperm.xlu0 %705, %v354
        %v707 = vpop.permute.xlu0 %706
        %709 = vset.pattern.permute.xlu0 1
        %710 = vperm.xlu0 %709, %v355
        %v711 = vpop.permute.xlu0 %710
        %713 = vset.pattern.permute.xlu0 1
        %714 = vperm.xlu0 %713, %v356
        %v715 = vpop.permute.xlu0 %714
        %717 = vset.pattern.permute.xlu0 1
        %718 = vperm.xlu0 %717, %v357
        %v719 = vpop.permute.xlu0 %718
        %721 = vset.pattern.permute.xlu0 1
        %722 = vperm.xlu0 %721, %v358
        %v723 = vpop.permute.xlu0 %722
        %725 = vset.pattern.permute.xlu0 1
        %726 = vperm.xlu0 %725, %v359
        %v727 = vpop.permute.xlu0 %726
        %729 = vset.pattern.permute.xlu0 1
        %730 = vperm.xlu0 %729, %v360
        %v731 = vpop.permute.xlu0 %730
        %v733 = vlaneseq
        %v734 = vshrl.u32 %v733, 7
        %v735 = vsub.s32 1, %v734
        %v736 = vrot.slane %v361, %v735
        %v737 = vlaneseq
        %v738 = vshrl.u32 %v737, 7
        %v739 = vsub.s32 5, %v738
        %v740 = vrot.slane %v361, %v739
        %v743 = vlaneseq
        %v744 = vshrl.u32 %v743, 7
        %v745 = vsub.s32 1, %v744
        %v746 = vrot.slane %v736, %v745
        %v747 = vlaneseq
        %v748 = vshrl.u32 %v747, 7
        %v749 = vsub.s32 1, %v748
        %v750 = vrot.slane %v740, %v749
        %v751 = vmul.f32 %v607, %v746
        %v752 = vmul.f32 %v607, %v750
        %v753 = vmul.f32 %v611, %v746
        %v754 = vmul.f32 %v611, %v750
        %v755 = vmul.f32 %v615, %v746
        %v756 = vmul.f32 %v615, %v750
        %v757 = vmul.f32 %v619, %v746
        %v758 = vmul.f32 %v619, %v750
        %v759 = vmul.f32 %v623, %v746
        %v760 = vmul.f32 %v623, %v750
        %v761 = vmul.f32 %v627, %v746
        %v762 = vmul.f32 %v627, %v750
        %v763 = vmul.f32 %v631, %v746
        %v764 = vmul.f32 %v631, %v750
        %v765 = vmul.f32 %v635, %v746
        %v766 = vmul.f32 %v635, %v750
        %v767 = vmul.f32 %v639, %v746
        %v768 = vmul.f32 %v639, %v750
        %v769 = vmul.f32 %v643, %v746
        %v770 = vmul.f32 %v643, %v750
        %v771 = vmul.f32 %v647, %v746
        %v772 = vmul.f32 %v647, %v750
        %v773 = vmul.f32 %v651, %v746
        %v774 = vmul.f32 %v651, %v750
        %v775 = vmul.f32 %v655, %v746
        %v776 = vmul.f32 %v655, %v750
        %v777 = vmul.f32 %v659, %v746
        %v778 = vmul.f32 %v659, %v750
        %v779 = vmul.f32 %v663, %v746
        %v780 = vmul.f32 %v663, %v750
        %v781 = vmul.f32 %v667, %v746
        %v782 = vmul.f32 %v667, %v750
        %v783 = vmul.f32 %v671, %v746
        %v784 = vmul.f32 %v671, %v750
        %v785 = vmul.f32 %v675, %v746
        %v786 = vmul.f32 %v675, %v750
        %v787 = vmul.f32 %v679, %v746
        %v788 = vmul.f32 %v679, %v750
        %v789 = vmul.f32 %v683, %v746
        %v790 = vmul.f32 %v683, %v750
        %v791 = vmul.f32 %v687, %v746
        %v792 = vmul.f32 %v687, %v750
        %v793 = vmul.f32 %v691, %v746
        %v794 = vmul.f32 %v691, %v750
        %v795 = vmul.f32 %v695, %v746
        %v796 = vmul.f32 %v695, %v750
        %v797 = vmul.f32 %v699, %v746
        %v798 = vmul.f32 %v699, %v750
        %v799 = vmul.f32 %v703, %v746
        %v800 = vmul.f32 %v703, %v750
        %v801 = vmul.f32 %v707, %v746
        %v802 = vmul.f32 %v707, %v750
        %v803 = vmul.f32 %v711, %v746
        %v804 = vmul.f32 %v711, %v750
        %v805 = vmul.f32 %v715, %v746
        %v806 = vmul.f32 %v715, %v750
        %v807 = vmul.f32 %v719, %v746
        %v808 = vmul.f32 %v719, %v750
        %v809 = vmul.f32 %v723, %v746
        %v810 = vmul.f32 %v723, %v750
        %v811 = vmul.f32 %v727, %v746
        %v812 = vmul.f32 %v727, %v750
        %v813 = vmul.f32 %v731, %v746
        %v814 = vmul.f32 %v731, %v750
        %v815 = vadd.f32 %v541, %v751
        %v816 = vadd.f32 %v542, %v752
        %v817 = vadd.f32 %v543, %v753
        %v818 = vadd.f32 %v544, %v754
        %v819 = vadd.f32 %v545, %v755
        %v820 = vadd.f32 %v546, %v756
        %v821 = vadd.f32 %v547, %v757
        %v822 = vadd.f32 %v548, %v758
        %v823 = vadd.f32 %v549, %v759
        %v824 = vadd.f32 %v550, %v760
        %v825 = vadd.f32 %v551, %v761
        %v826 = vadd.f32 %v552, %v762
        %v827 = vadd.f32 %v553, %v763
        %v828 = vadd.f32 %v554, %v764
        %v829 = vadd.f32 %v555, %v765
        %v830 = vadd.f32 %v556, %v766
        %v831 = vadd.f32 %v557, %v767
        %v832 = vadd.f32 %v558, %v768
        %v833 = vadd.f32 %v559, %v769
        %v834 = vadd.f32 %v560, %v770
        %v835 = vadd.f32 %v561, %v771
        %v836 = vadd.f32 %v562, %v772
        %v837 = vadd.f32 %v563, %v773
        %v838 = vadd.f32 %v564, %v774
        %v839 = vadd.f32 %v565, %v775
        %v840 = vadd.f32 %v566, %v776
        %v841 = vadd.f32 %v567, %v777
        %v842 = vadd.f32 %v568, %v778
        %v843 = vadd.f32 %v569, %v779
        %v844 = vadd.f32 %v570, %v780
        %v845 = vadd.f32 %v571, %v781
        %v846 = vadd.f32 %v572, %v782
        %v847 = vadd.f32 %v573, %v783
        %v848 = vadd.f32 %v574, %v784
        %v849 = vadd.f32 %v575, %v785
        %v850 = vadd.f32 %v576, %v786
        %v851 = vadd.f32 %v577, %v787
        %v852 = vadd.f32 %v578, %v788
        %v853 = vadd.f32 %v579, %v789
        %v854 = vadd.f32 %v580, %v790
        %v855 = vadd.f32 %v581, %v791
        %v856 = vadd.f32 %v582, %v792
        %v857 = vadd.f32 %v583, %v793
        %v858 = vadd.f32 %v584, %v794
        %v859 = vadd.f32 %v585, %v795
        %v860 = vadd.f32 %v586, %v796
        %v861 = vadd.f32 %v587, %v797
        %v862 = vadd.f32 %v588, %v798
        %v863 = vadd.f32 %v589, %v799
        %v864 = vadd.f32 %v590, %v800
        %v865 = vadd.f32 %v591, %v801
        %v866 = vadd.f32 %v592, %v802
        %v867 = vadd.f32 %v593, %v803
        %v868 = vadd.f32 %v594, %v804
        %v869 = vadd.f32 %v595, %v805
        %v870 = vadd.f32 %v596, %v806
        %v871 = vadd.f32 %v597, %v807
        %v872 = vadd.f32 %v598, %v808
        %v873 = vadd.f32 %v599, %v809
        %v874 = vadd.f32 %v600, %v810
        %v875 = vadd.f32 %v601, %v811
        %v876 = vadd.f32 %v602, %v812
        %v877 = vadd.f32 %v603, %v813
        %v878 = vadd.f32 %v604, %v814
        %879 = vset.pattern.permute.xlu0 2
        %880 = vperm.xlu0 %879, %v329
        %v881 = vpop.permute.xlu0 %880
        %883 = vset.pattern.permute.xlu0 2
        %884 = vperm.xlu0 %883, %v330
        %v885 = vpop.permute.xlu0 %884
        %887 = vset.pattern.permute.xlu0 2
        %888 = vperm.xlu0 %887, %v331
        %v889 = vpop.permute.xlu0 %888
        %891 = vset.pattern.permute.xlu0 2
        %892 = vperm.xlu0 %891, %v332
        %v893 = vpop.permute.xlu0 %892
        %895 = vset.pattern.permute.xlu0 2
        %896 = vperm.xlu0 %895, %v333
        %v897 = vpop.permute.xlu0 %896
        %899 = vset.pattern.permute.xlu0 2
        %900 = vperm.xlu0 %899, %v334
        %v901 = vpop.permute.xlu0 %900
        %903 = vset.pattern.permute.xlu0 2
        %904 = vperm.xlu0 %903, %v335
        %v905 = vpop.permute.xlu0 %904
        %907 = vset.pattern.permute.xlu0 2
        %908 = vperm.xlu0 %907, %v336
        %v909 = vpop.permute.xlu0 %908
        %911 = vset.pattern.permute.xlu0 2
        %912 = vperm.xlu0 %911, %v337
        %v913 = vpop.permute.xlu0 %912
        %915 = vset.pattern.permute.xlu0 2
        %916 = vperm.xlu0 %915, %v338
        %v917 = vpop.permute.xlu0 %916
        %919 = vset.pattern.permute.xlu0 2
        %920 = vperm.xlu0 %919, %v339
        %v921 = vpop.permute.xlu0 %920
        %923 = vset.pattern.permute.xlu0 2
        %924 = vperm.xlu0 %923, %v340
        %v925 = vpop.permute.xlu0 %924
        %927 = vset.pattern.permute.xlu0 2
        %928 = vperm.xlu0 %927, %v341
        %v929 = vpop.permute.xlu0 %928
        %931 = vset.pattern.permute.xlu0 2
        %932 = vperm.xlu0 %931, %v342
        %v933 = vpop.permute.xlu0 %932
        %935 = vset.pattern.permute.xlu0 2
        %936 = vperm.xlu0 %935, %v343
        %v937 = vpop.permute.xlu0 %936
        %939 = vset.pattern.permute.xlu0 2
        %940 = vperm.xlu0 %939, %v344
        %v941 = vpop.permute.xlu0 %940
        %943 = vset.pattern.permute.xlu0 2
        %944 = vperm.xlu0 %943, %v345
        %v945 = vpop.permute.xlu0 %944
        %947 = vset.pattern.permute.xlu0 2
        %948 = vperm.xlu0 %947, %v346
        %v949 = vpop.permute.xlu0 %948
        %951 = vset.pattern.permute.xlu0 2
        %952 = vperm.xlu0 %951, %v347
        %v953 = vpop.permute.xlu0 %952
        %955 = vset.pattern.permute.xlu0 2
        %956 = vperm.xlu0 %955, %v348
        %v957 = vpop.permute.xlu0 %956
        %959 = vset.pattern.permute.xlu0 2
        %960 = vperm.xlu0 %959, %v349
        %v961 = vpop.permute.xlu0 %960
        %963 = vset.pattern.permute.xlu0 2
        %964 = vperm.xlu0 %963, %v350
        %v965 = vpop.permute.xlu0 %964
        %967 = vset.pattern.permute.xlu0 2
        %968 = vperm.xlu0 %967, %v351
        %v969 = vpop.permute.xlu0 %968
        %971 = vset.pattern.permute.xlu0 2
        %972 = vperm.xlu0 %971, %v352
        %v973 = vpop.permute.xlu0 %972
        %975 = vset.pattern.permute.xlu0 2
        %976 = vperm.xlu0 %975, %v353
        %v977 = vpop.permute.xlu0 %976
        %979 = vset.pattern.permute.xlu0 2
        %980 = vperm.xlu0 %979, %v354
        %v981 = vpop.permute.xlu0 %980
        %983 = vset.pattern.permute.xlu0 2
        %984 = vperm.xlu0 %983, %v355
        %v985 = vpop.permute.xlu0 %984
        %987 = vset.pattern.permute.xlu0 2
        %988 = vperm.xlu0 %987, %v356
        %v989 = vpop.permute.xlu0 %988
        %991 = vset.pattern.permute.xlu0 2
        %992 = vperm.xlu0 %991, %v357
        %v993 = vpop.permute.xlu0 %992
        %995 = vset.pattern.permute.xlu0 2
        %996 = vperm.xlu0 %995, %v358
        %v997 = vpop.permute.xlu0 %996
        %999 = vset.pattern.permute.xlu0 2
        %1000 = vperm.xlu0 %999, %v359
        %v1001 = vpop.permute.xlu0 %1000
        %1003 = vset.pattern.permute.xlu0 2
        %1004 = vperm.xlu0 %1003, %v360
        %v1005 = vpop.permute.xlu0 %1004
        %v1007 = vlaneseq
        %v1008 = vshrl.u32 %v1007, 7
        %v1009 = vsub.s32 2, %v1008
        %v1010 = vrot.slane %v361, %v1009
        %v1011 = vlaneseq
        %v1012 = vshrl.u32 %v1011, 7
        %v1013 = vsub.s32 6, %v1012
        %v1014 = vrot.slane %v361, %v1013
        %v1017 = vlaneseq
        %v1018 = vshrl.u32 %v1017, 7
        %v1019 = vsub.s32 2, %v1018
        %v1020 = vrot.slane %v1010, %v1019
        %v1021 = vlaneseq
        %v1022 = vshrl.u32 %v1021, 7
        %v1023 = vsub.s32 2, %v1022
        %v1024 = vrot.slane %v1014, %v1023
        %v1025 = vmul.f32 %v881, %v1020
        %v1026 = vmul.f32 %v881, %v1024
        %v1027 = vmul.f32 %v885, %v1020
        %v1028 = vmul.f32 %v885, %v1024
        %v1029 = vmul.f32 %v889, %v1020
        %v1030 = vmul.f32 %v889, %v1024
        %v1031 = vmul.f32 %v893, %v1020
        %v1032 = vmul.f32 %v893, %v1024
        %v1033 = vmul.f32 %v897, %v1020
        %v1034 = vmul.f32 %v897, %v1024
        %v1035 = vmul.f32 %v901, %v1020
        %v1036 = vmul.f32 %v901, %v1024
        %v1037 = vmul.f32 %v905, %v1020
        %v1038 = vmul.f32 %v905, %v1024
        %v1039 = vmul.f32 %v909, %v1020
        %v1040 = vmul.f32 %v909, %v1024
        %v1041 = vmul.f32 %v913, %v1020
        %v1042 = vmul.f32 %v913, %v1024
        %v1043 = vmul.f32 %v917, %v1020
        %v1044 = vmul.f32 %v917, %v1024
        %v1045 = vmul.f32 %v921, %v1020
        %v1046 = vmul.f32 %v921, %v1024
        %v1047 = vmul.f32 %v925, %v1020
        %v1048 = vmul.f32 %v925, %v1024
        %v1049 = vmul.f32 %v929, %v1020
        %v1050 = vmul.f32 %v929, %v1024
        %v1051 = vmul.f32 %v933, %v1020
        %v1052 = vmul.f32 %v933, %v1024
        %v1053 = vmul.f32 %v937, %v1020
        %v1054 = vmul.f32 %v937, %v1024
        %v1055 = vmul.f32 %v941, %v1020
        %v1056 = vmul.f32 %v941, %v1024
        %v1057 = vmul.f32 %v945, %v1020
        %v1058 = vmul.f32 %v945, %v1024
        %v1059 = vmul.f32 %v949, %v1020
        %v1060 = vmul.f32 %v949, %v1024
        %v1061 = vmul.f32 %v953, %v1020
        %v1062 = vmul.f32 %v953, %v1024
        %v1063 = vmul.f32 %v957, %v1020
        %v1064 = vmul.f32 %v957, %v1024
        %v1065 = vmul.f32 %v961, %v1020
        %v1066 = vmul.f32 %v961, %v1024
        %v1067 = vmul.f32 %v965, %v1020
        %v1068 = vmul.f32 %v965, %v1024
        %v1069 = vmul.f32 %v969, %v1020
        %v1070 = vmul.f32 %v969, %v1024
        %v1071 = vmul.f32 %v973, %v1020
        %v1072 = vmul.f32 %v973, %v1024
        %v1073 = vmul.f32 %v977, %v1020
        %v1074 = vmul.f32 %v977, %v1024
        %v1075 = vmul.f32 %v981, %v1020
        %v1076 = vmul.f32 %v981, %v1024
        %v1077 = vmul.f32 %v985, %v1020
        %v1078 = vmul.f32 %v985, %v1024
        %v1079 = vmul.f32 %v989, %v1020
        %v1080 = vmul.f32 %v989, %v1024
        %v1081 = vmul.f32 %v993, %v1020
        %v1082 = vmul.f32 %v993, %v1024
        %v1083 = vmul.f32 %v997, %v1020
        %v1084 = vmul.f32 %v997, %v1024
        %v1085 = vmul.f32 %v1001, %v1020
        %v1086 = vmul.f32 %v1001, %v1024
        %v1087 = vmul.f32 %v1005, %v1020
        %v1088 = vmul.f32 %v1005, %v1024
        %v1089 = vadd.f32 %v815, %v1025
        %v1090 = vadd.f32 %v816, %v1026
        %v1091 = vadd.f32 %v817, %v1027
        %v1092 = vadd.f32 %v818, %v1028
        %v1093 = vadd.f32 %v819, %v1029
        %v1094 = vadd.f32 %v820, %v1030
        %v1095 = vadd.f32 %v821, %v1031
        %v1096 = vadd.f32 %v822, %v1032
        %v1097 = vadd.f32 %v823, %v1033
        %v1098 = vadd.f32 %v824, %v1034
        %v1099 = vadd.f32 %v825, %v1035
        %v1100 = vadd.f32 %v826, %v1036
        %v1101 = vadd.f32 %v827, %v1037
        %v1102 = vadd.f32 %v828, %v1038
        %v1103 = vadd.f32 %v829, %v1039
        %v1104 = vadd.f32 %v830, %v1040
        %v1105 = vadd.f32 %v831, %v1041
        %v1106 = vadd.f32 %v832, %v1042
        %v1107 = vadd.f32 %v833, %v1043
        %v1108 = vadd.f32 %v834, %v1044
        %v1109 = vadd.f32 %v835, %v1045
        %v1110 = vadd.f32 %v836, %v1046
        %v1111 = vadd.f32 %v837, %v1047
        %v1112 = vadd.f32 %v838, %v1048
        %v1113 = vadd.f32 %v839, %v1049
        %v1114 = vadd.f32 %v840, %v1050
        %v1115 = vadd.f32 %v841, %v1051
        %v1116 = vadd.f32 %v842, %v1052
        %v1117 = vadd.f32 %v843, %v1053
        %v1118 = vadd.f32 %v844, %v1054
        %v1119 = vadd.f32 %v845, %v1055
        %v1120 = vadd.f32 %v846, %v1056
        %v1121 = vadd.f32 %v847, %v1057
        %v1122 = vadd.f32 %v848, %v1058
        %v1123 = vadd.f32 %v849, %v1059
        %v1124 = vadd.f32 %v850, %v1060
        %v1125 = vadd.f32 %v851, %v1061
        %v1126 = vadd.f32 %v852, %v1062
        %v1127 = vadd.f32 %v853, %v1063
        %v1128 = vadd.f32 %v854, %v1064
        %v1129 = vadd.f32 %v855, %v1065
        %v1130 = vadd.f32 %v856, %v1066
        %v1131 = vadd.f32 %v857, %v1067
        %v1132 = vadd.f32 %v858, %v1068
        %v1133 = vadd.f32 %v859, %v1069
        %v1134 = vadd.f32 %v860, %v1070
        %v1135 = vadd.f32 %v861, %v1071
        %v1136 = vadd.f32 %v862, %v1072
        %v1137 = vadd.f32 %v863, %v1073
        %v1138 = vadd.f32 %v864, %v1074
        %v1139 = vadd.f32 %v865, %v1075
        %v1140 = vadd.f32 %v866, %v1076
        %v1141 = vadd.f32 %v867, %v1077
        %v1142 = vadd.f32 %v868, %v1078
        %v1143 = vadd.f32 %v869, %v1079
        %v1144 = vadd.f32 %v870, %v1080
        %v1145 = vadd.f32 %v871, %v1081
        %v1146 = vadd.f32 %v872, %v1082
        %v1147 = vadd.f32 %v873, %v1083
        %v1148 = vadd.f32 %v874, %v1084
        %v1149 = vadd.f32 %v875, %v1085
        %v1150 = vadd.f32 %v876, %v1086
        %v1151 = vadd.f32 %v877, %v1087
        %v1152 = vadd.f32 %v878, %v1088
        %1153 = vset.pattern.permute.xlu0 3
        %1154 = vperm.xlu0 %1153, %v329
        %v1155 = vpop.permute.xlu0 %1154
        %1157 = vset.pattern.permute.xlu0 3
        %1158 = vperm.xlu0 %1157, %v330
        %v1159 = vpop.permute.xlu0 %1158
        %1161 = vset.pattern.permute.xlu0 3
        %1162 = vperm.xlu0 %1161, %v331
        %v1163 = vpop.permute.xlu0 %1162
        %1165 = vset.pattern.permute.xlu0 3
        %1166 = vperm.xlu0 %1165, %v332
        %v1167 = vpop.permute.xlu0 %1166
        %1169 = vset.pattern.permute.xlu0 3
        %1170 = vperm.xlu0 %1169, %v333
        %v1171 = vpop.permute.xlu0 %1170
        %1173 = vset.pattern.permute.xlu0 3
        %1174 = vperm.xlu0 %1173, %v334
        %v1175 = vpop.permute.xlu0 %1174
        %1177 = vset.pattern.permute.xlu0 3
        %1178 = vperm.xlu0 %1177, %v335
        %v1179 = vpop.permute.xlu0 %1178
        %1181 = vset.pattern.permute.xlu0 3
        %1182 = vperm.xlu0 %1181, %v336
        %v1183 = vpop.permute.xlu0 %1182
        %1185 = vset.pattern.permute.xlu0 3
        %1186 = vperm.xlu0 %1185, %v337
        %v1187 = vpop.permute.xlu0 %1186
        %1189 = vset.pattern.permute.xlu0 3
        %1190 = vperm.xlu0 %1189, %v338
        %v1191 = vpop.permute.xlu0 %1190
        %1193 = vset.pattern.permute.xlu0 3
        %1194 = vperm.xlu0 %1193, %v339
        %v1195 = vpop.permute.xlu0 %1194
        %1197 = vset.pattern.permute.xlu0 3
        %1198 = vperm.xlu0 %1197, %v340
        %v1199 = vpop.permute.xlu0 %1198
        %1201 = vset.pattern.permute.xlu0 3
        %1202 = vperm.xlu0 %1201, %v341
        %v1203 = vpop.permute.xlu0 %1202
        %1205 = vset.pattern.permute.xlu0 3
        %1206 = vperm.xlu0 %1205, %v342
        %v1207 = vpop.permute.xlu0 %1206
        %1209 = vset.pattern.permute.xlu0 3
        %1210 = vperm.xlu0 %1209, %v343
        %v1211 = vpop.permute.xlu0 %1210
        %1213 = vset.pattern.permute.xlu0 3
        %1214 = vperm.xlu0 %1213, %v344
        %v1215 = vpop.permute.xlu0 %1214
        %1217 = vset.pattern.permute.xlu0 3
        %1218 = vperm.xlu0 %1217, %v345
        %v1219 = vpop.permute.xlu0 %1218
        %1221 = vset.pattern.permute.xlu0 3
        %1222 = vperm.xlu0 %1221, %v346
        %v1223 = vpop.permute.xlu0 %1222
        %1225 = vset.pattern.permute.xlu0 3
        %1226 = vperm.xlu0 %1225, %v347
        %v1227 = vpop.permute.xlu0 %1226
        %1229 = vset.pattern.permute.xlu0 3
        %1230 = vperm.xlu0 %1229, %v348
        %v1231 = vpop.permute.xlu0 %1230
        %1233 = vset.pattern.permute.xlu0 3
        %1234 = vperm.xlu0 %1233, %v349
        %v1235 = vpop.permute.xlu0 %1234
        %1237 = vset.pattern.permute.xlu0 3
        %1238 = vperm.xlu0 %1237, %v350
        %v1239 = vpop.permute.xlu0 %1238
        %1241 = vset.pattern.permute.xlu0 3
        %1242 = vperm.xlu0 %1241, %v351
        %v1243 = vpop.permute.xlu0 %1242
        %1245 = vset.pattern.permute.xlu0 3
        %1246 = vperm.xlu0 %1245, %v352
        %v1247 = vpop.permute.xlu0 %1246
        %1249 = vset.pattern.permute.xlu0 3
        %1250 = vperm.xlu0 %1249, %v353
        %v1251 = vpop.permute.xlu0 %1250
        %1253 = vset.pattern.permute.xlu0 3
        %1254 = vperm.xlu0 %1253, %v354
        %v1255 = vpop.permute.xlu0 %1254
        %1257 = vset.pattern.permute.xlu0 3
        %1258 = vperm.xlu0 %1257, %v355
        %v1259 = vpop.permute.xlu0 %1258
        %1261 = vset.pattern.permute.xlu0 3
        %1262 = vperm.xlu0 %1261, %v356
        %v1263 = vpop.permute.xlu0 %1262
        %1265 = vset.pattern.permute.xlu0 3
        %1266 = vperm.xlu0 %1265, %v357
        %v1267 = vpop.permute.xlu0 %1266
        %1269 = vset.pattern.permute.xlu0 3
        %1270 = vperm.xlu0 %1269, %v358
        %v1271 = vpop.permute.xlu0 %1270
        %1273 = vset.pattern.permute.xlu0 3
        %1274 = vperm.xlu0 %1273, %v359
        %v1275 = vpop.permute.xlu0 %1274
        %1277 = vset.pattern.permute.xlu0 3
        %1278 = vperm.xlu0 %1277, %v360
        %v1279 = vpop.permute.xlu0 %1278
        %v1281 = vlaneseq
        %v1282 = vshrl.u32 %v1281, 7
        %v1283 = vsub.s32 3, %v1282
        %v1284 = vrot.slane %v361, %v1283
        %v1285 = vlaneseq
        %v1286 = vshrl.u32 %v1285, 7
        %v1287 = vsub.s32 7, %v1286
        %v1288 = vrot.slane %v361, %v1287
        %v1291 = vlaneseq
        %v1292 = vshrl.u32 %v1291, 7
        %v1293 = vsub.s32 3, %v1292
        %v1294 = vrot.slane %v1284, %v1293
        %v1295 = vlaneseq
        %v1296 = vshrl.u32 %v1295, 7
        %v1297 = vsub.s32 3, %v1296
        %v1298 = vrot.slane %v1288, %v1297
        %v1299 = vmul.f32 %v1155, %v1294
        %v1300 = vmul.f32 %v1155, %v1298
        %v1301 = vmul.f32 %v1159, %v1294
        %v1302 = vmul.f32 %v1159, %v1298
        %v1303 = vmul.f32 %v1163, %v1294
        %v1304 = vmul.f32 %v1163, %v1298
        %v1305 = vmul.f32 %v1167, %v1294
        %v1306 = vmul.f32 %v1167, %v1298
        %v1307 = vmul.f32 %v1171, %v1294
        %v1308 = vmul.f32 %v1171, %v1298
        %v1309 = vmul.f32 %v1175, %v1294
        %v1310 = vmul.f32 %v1175, %v1298
        %v1311 = vmul.f32 %v1179, %v1294
        %v1312 = vmul.f32 %v1179, %v1298
        %v1313 = vmul.f32 %v1183, %v1294
        %v1314 = vmul.f32 %v1183, %v1298
        %v1315 = vmul.f32 %v1187, %v1294
        %v1316 = vmul.f32 %v1187, %v1298
        %v1317 = vmul.f32 %v1191, %v1294
        %v1318 = vmul.f32 %v1191, %v1298
        %v1319 = vmul.f32 %v1195, %v1294
        %v1320 = vmul.f32 %v1195, %v1298
        %v1321 = vmul.f32 %v1199, %v1294
        %v1322 = vmul.f32 %v1199, %v1298
        %v1323 = vmul.f32 %v1203, %v1294
        %v1324 = vmul.f32 %v1203, %v1298
        %v1325 = vmul.f32 %v1207, %v1294
        %v1326 = vmul.f32 %v1207, %v1298
        %v1327 = vmul.f32 %v1211, %v1294
        %v1328 = vmul.f32 %v1211, %v1298
        %v1329 = vmul.f32 %v1215, %v1294
        %v1330 = vmul.f32 %v1215, %v1298
        %v1331 = vmul.f32 %v1219, %v1294
        %v1332 = vmul.f32 %v1219, %v1298
        %v1333 = vmul.f32 %v1223, %v1294
        %v1334 = vmul.f32 %v1223, %v1298
        %v1335 = vmul.f32 %v1227, %v1294
        %v1336 = vmul.f32 %v1227, %v1298
        %v1337 = vmul.f32 %v1231, %v1294
        %v1338 = vmul.f32 %v1231, %v1298
        %v1339 = vmul.f32 %v1235, %v1294
        %v1340 = vmul.f32 %v1235, %v1298
        %v1341 = vmul.f32 %v1239, %v1294
        %v1342 = vmul.f32 %v1239, %v1298
        %v1343 = vmul.f32 %v1243, %v1294
        %v1344 = vmul.f32 %v1243, %v1298
        %v1345 = vmul.f32 %v1247, %v1294
        %v1346 = vmul.f32 %v1247, %v1298
        %v1347 = vmul.f32 %v1251, %v1294
        %v1348 = vmul.f32 %v1251, %v1298
        %v1349 = vmul.f32 %v1255, %v1294
        %v1350 = vmul.f32 %v1255, %v1298
        %v1351 = vmul.f32 %v1259, %v1294
        %v1352 = vmul.f32 %v1259, %v1298
        %v1353 = vmul.f32 %v1263, %v1294
        %v1354 = vmul.f32 %v1263, %v1298
        %v1355 = vmul.f32 %v1267, %v1294
        %v1356 = vmul.f32 %v1267, %v1298
        %v1357 = vmul.f32 %v1271, %v1294
        %v1358 = vmul.f32 %v1271, %v1298
        %v1359 = vmul.f32 %v1275, %v1294
        %v1360 = vmul.f32 %v1275, %v1298
        %v1361 = vmul.f32 %v1279, %v1294
        %v1362 = vmul.f32 %v1279, %v1298
        %v1363 = vadd.f32 %v1089, %v1299
        %v1364 = vadd.f32 %v1090, %v1300
        %v1365 = vadd.f32 %v1091, %v1301
        %v1366 = vadd.f32 %v1092, %v1302
        %v1367 = vadd.f32 %v1093, %v1303
        %v1368 = vadd.f32 %v1094, %v1304
        %v1369 = vadd.f32 %v1095, %v1305
        %v1370 = vadd.f32 %v1096, %v1306
        %v1371 = vadd.f32 %v1097, %v1307
        %v1372 = vadd.f32 %v1098, %v1308
        %v1373 = vadd.f32 %v1099, %v1309
        %v1374 = vadd.f32 %v1100, %v1310
        %v1375 = vadd.f32 %v1101, %v1311
        %v1376 = vadd.f32 %v1102, %v1312
        %v1377 = vadd.f32 %v1103, %v1313
        %v1378 = vadd.f32 %v1104, %v1314
        %v1379 = vadd.f32 %v1105, %v1315
        %v1380 = vadd.f32 %v1106, %v1316
        %v1381 = vadd.f32 %v1107, %v1317
        %v1382 = vadd.f32 %v1108, %v1318
        %v1383 = vadd.f32 %v1109, %v1319
        %v1384 = vadd.f32 %v1110, %v1320
        %v1385 = vadd.f32 %v1111, %v1321
        %v1386 = vadd.f32 %v1112, %v1322
        %v1387 = vadd.f32 %v1113, %v1323
        %v1388 = vadd.f32 %v1114, %v1324
        %v1389 = vadd.f32 %v1115, %v1325
        %v1390 = vadd.f32 %v1116, %v1326
        %v1391 = vadd.f32 %v1117, %v1327
        %v1392 = vadd.f32 %v1118, %v1328
        %v1393 = vadd.f32 %v1119, %v1329
        %v1394 = vadd.f32 %v1120, %v1330
        %v1395 = vadd.f32 %v1121, %v1331
        %v1396 = vadd.f32 %v1122, %v1332
        %v1397 = vadd.f32 %v1123, %v1333
        %v1398 = vadd.f32 %v1124, %v1334
        %v1399 = vadd.f32 %v1125, %v1335
        %v1400 = vadd.f32 %v1126, %v1336
        %v1401 = vadd.f32 %v1127, %v1337
        %v1402 = vadd.f32 %v1128, %v1338
        %v1403 = vadd.f32 %v1129, %v1339
        %v1404 = vadd.f32 %v1130, %v1340
        %v1405 = vadd.f32 %v1131, %v1341
        %v1406 = vadd.f32 %v1132, %v1342
        %v1407 = vadd.f32 %v1133, %v1343
        %v1408 = vadd.f32 %v1134, %v1344
        %v1409 = vadd.f32 %v1135, %v1345
        %v1410 = vadd.f32 %v1136, %v1346
        %v1411 = vadd.f32 %v1137, %v1347
        %v1412 = vadd.f32 %v1138, %v1348
        %v1413 = vadd.f32 %v1139, %v1349
        %v1414 = vadd.f32 %v1140, %v1350
        %v1415 = vadd.f32 %v1141, %v1351
        %v1416 = vadd.f32 %v1142, %v1352
        %v1417 = vadd.f32 %v1143, %v1353
        %v1418 = vadd.f32 %v1144, %v1354
        %v1419 = vadd.f32 %v1145, %v1355
        %v1420 = vadd.f32 %v1146, %v1356
        %v1421 = vadd.f32 %v1147, %v1357
        %v1422 = vadd.f32 %v1148, %v1358
        %v1423 = vadd.f32 %v1149, %v1359
        %v1424 = vadd.f32 %v1150, %v1360
        %v1425 = vadd.f32 %v1151, %v1361
        %v1426 = vadd.f32 %v1152, %v1362
        %p1427 = scmp.eq.s32.totalorder %s19, 0
        %p1428 = scmp.eq.s32.totalorder %s20, 0
        %p1429 = pnand %p1427, %p1428
        %p1430 = pneg %p1429
        // Predicated region
        $region71: #{tpu_custom_call.1} parent=65 // pred_check
          _
        $region72: #{tpu_custom_call.1} parent=65 // pred_check_branch
          %1432 = sbr.rel (%p1429) target = $region74
        $region73: #{tpu_custom_call.1} parent=65 // pred_region
          %1433 = vst [vmem:[#allocation2] sm:$0x3] 0.0
          %1434 = vst [vmem:[#allocation3] sm:$0x3] 0.0
          %1435 = vst [vmem:[#allocation4] sm:$0x1] 0.0
          %1436 = vst [vmem:[#allocation5] sm:$0x1] 0.0
          %1437 = vst [vmem:[#allocation6] sm:$0x3] 0.0
          %1438 = vst [vmem:[#allocation7] sm:$0x3] 0.0
        $region74: #{tpu_custom_call.1} parent=65 // pred_fallthru
          _
        // Predicated region
        $region75: #{tpu_custom_call.1} parent=65 // pred_check
          %p1439 = pneg %p1427
        $region76: #{tpu_custom_call.1} parent=65 // pred_check_branch
          %1441 = sbr.rel (%p1439) target = $region78
        $region77: #{tpu_custom_call.1} parent=65 // pred_region
          %v1442 = vld [vmem:[#allocation2] sm:$0x3]
          %v1443 = vadd.f32 %v1363, %v1365
          %v1444 = vadd.f32 %v1443, %v1367
          %v1445 = vadd.f32 %v1444, %v1369
          %v1446 = vadd.f32 %v1445, %v1371
          %v1447 = vadd.f32 %v1446, %v1373
          %v1448 = vadd.f32 %v1447, %v1375
          %v1449 = vadd.f32 %v1448, %v1377
          %v1450 = vadd.f32 %v1449, %v1379
          %v1451 = vadd.f32 %v1450, %v1381
          %v1452 = vadd.f32 %v1451, %v1383
          %v1453 = vadd.f32 %v1452, %v1385
          %v1454 = vadd.f32 %v1453, %v1387
          %v1455 = vadd.f32 %v1454, %v1389
          %v1456 = vadd.f32 %v1455, %v1391
          %v1457 = vadd.f32 %v1456, %v1393
          %v1458 = vrot.slane %v1457, 4
          %v1459 = vadd.f32 %v1457, %v1458
          %v1460 = vrot.slane %v1459, 2
          %v1461 = vadd.f32 %v1459, %v1460
          %v1462 = vrot.slane %v1461, 1
          %v1463 = vadd.f32 %v1461, %v1462
          %v1464 = vadd.f32 %v1395, %v1397
          %v1465 = vadd.f32 %v1464, %v1399
          %v1466 = vadd.f32 %v1465, %v1401
          %v1467 = vadd.f32 %v1466, %v1403
          %v1468 = vadd.f32 %v1467, %v1405
          %v1469 = vadd.f32 %v1468, %v1407
          %v1470 = vadd.f32 %v1469, %v1409
          %v1471 = vadd.f32 %v1470, %v1411
          %v1472 = vadd.f32 %v1471, %v1413
          %v1473 = vadd.f32 %v1472, %v1415
          %v1474 = vadd.f32 %v1473, %v1417
          %v1475 = vadd.f32 %v1474, %v1419
          %v1476 = vadd.f32 %v1475, %v1421
          %v1477 = vadd.f32 %v1476, %v1423
          %v1478 = vadd.f32 %v1477, %v1425
          %v1479 = vrot.slane %v1478, 4
          %v1480 = vadd.f32 %v1478, %v1479
          %v1481 = vrot.slane %v1480, 2
          %v1482 = vadd.f32 %v1480, %v1481
          %v1483 = vrot.slane %v1482, 1
          %v1484 = vadd.f32 %v1482, %v1483
          %vm1487 = vcmask 1041409
          %v1488 = vsel %vm1487, %v1484, %v1463
          %v1490 = vadd.f32 %v1442, %v1488
          %1491 = vst [vmem:[#allocation2] sm:$0x3] %v1490
          %v1492 = vld [vmem:[#allocation3] sm:$0x3]
          %v1493 = vmul.f32 %v1363, %v1363
          %v1494 = vmul.f32 %v1365, %v1365
          %v1495 = vmul.f32 %v1367, %v1367
          %v1496 = vmul.f32 %v1369, %v1369
          %v1497 = vmul.f32 %v1371, %v1371
          %v1498 = vmul.f32 %v1373, %v1373
          %v1499 = vmul.f32 %v1375, %v1375
          %v1500 = vmul.f32 %v1377, %v1377
          %v1501 = vmul.f32 %v1379, %v1379
          %v1502 = vmul.f32 %v1381, %v1381
          %v1503 = vmul.f32 %v1383, %v1383
          %v1504 = vmul.f32 %v1385, %v1385
          %v1505 = vmul.f32 %v1387, %v1387
          %v1506 = vmul.f32 %v1389, %v1389
          %v1507 = vmul.f32 %v1391, %v1391
          %v1508 = vmul.f32 %v1393, %v1393
          %v1509 = vmul.f32 %v1395, %v1395
          %v1510 = vmul.f32 %v1397, %v1397
          %v1511 = vmul.f32 %v1399, %v1399
          %v1512 = vmul.f32 %v1401, %v1401
          %v1513 = vmul.f32 %v1403, %v1403
          %v1514 = vmul.f32 %v1405, %v1405
          %v1515 = vmul.f32 %v1407, %v1407
          %v1516 = vmul.f32 %v1409, %v1409
          %v1517 = vmul.f32 %v1411, %v1411
          %v1518 = vmul.f32 %v1413, %v1413
          %v1519 = vmul.f32 %v1415, %v1415
          %v1520 = vmul.f32 %v1417, %v1417
          %v1521 = vmul.f32 %v1419, %v1419
          %v1522 = vmul.f32 %v1421, %v1421
          %v1523 = vmul.f32 %v1423, %v1423
          %v1524 = vmul.f32 %v1425, %v1425
          %v1525 = vadd.f32 %v1493, %v1494
          %v1526 = vadd.f32 %v1525, %v1495
          %v1527 = vadd.f32 %v1526, %v1496
          %v1528 = vadd.f32 %v1527, %v1497
          %v1529 = vadd.f32 %v1528, %v1498
          %v1530 = vadd.f32 %v1529, %v1499
          %v1531 = vadd.f32 %v1530, %v1500
          %v1532 = vadd.f32 %v1531, %v1501
          %v1533 = vadd.f32 %v1532, %v1502
          %v1534 = vadd.f32 %v1533, %v1503
          %v1535 = vadd.f32 %v1534, %v1504
          %v1536 = vadd.f32 %v1535, %v1505
          %v1537 = vadd.f32 %v1536, %v1506
          %v1538 = vadd.f32 %v1537, %v1507
          %v1539 = vadd.f32 %v1538, %v1508
          %v1540 = vrot.slane %v1539, 4
          %v1541 = vadd.f32 %v1539, %v1540
          %v1542 = vrot.slane %v1541, 2
          %v1543 = vadd.f32 %v1541, %v1542
          %v1544 = vrot.slane %v1543, 1
          %v1545 = vadd.f32 %v1543, %v1544
          %v1546 = vadd.f32 %v1509, %v1510
          %v1547 = vadd.f32 %v1546, %v1511
          %v1548 = vadd.f32 %v1547, %v1512
          %v1549 = vadd.f32 %v1548, %v1513
          %v1550 = vadd.f32 %v1549, %v1514
          %v1551 = vadd.f32 %v1550, %v1515
          %v1552 = vadd.f32 %v1551, %v1516
          %v1553 = vadd.f32 %v1552, %v1517
          %v1554 = vadd.f32 %v1553, %v1518
          %v1555 = vadd.f32 %v1554, %v1519
          %v1556 = vadd.f32 %v1555, %v1520
          %v1557 = vadd.f32 %v1556, %v1521
          %v1558 = vadd.f32 %v1557, %v1522
          %v1559 = vadd.f32 %v1558, %v1523
          %v1560 = vadd.f32 %v1559, %v1524
          %v1561 = vrot.slane %v1560, 4
          %v1562 = vadd.f32 %v1560, %v1561
          %v1563 = vrot.slane %v1562, 2
          %v1564 = vadd.f32 %v1562, %v1563
          %v1565 = vrot.slane %v1564, 1
          %v1566 = vadd.f32 %v1564, %v1565
          %v1569 = vsel %vm1487, %v1566, %v1545
          %v1571 = vadd.f32 %v1492, %v1569
          %1572 = vst [vmem:[#allocation3] sm:$0x3] %v1571
          %v1573 = vld [vmem:[#allocation4] sm:$0x1]
          %v1574 = vadd.f32 %v1364, %v1366
          %v1575 = vadd.f32 %v1574, %v1368
          %v1576 = vadd.f32 %v1575, %v1370
          %v1577 = vadd.f32 %v1576, %v1372
          %v1578 = vadd.f32 %v1577, %v1374
          %v1579 = vadd.f32 %v1578, %v1376
          %v1580 = vadd.f32 %v1579, %v1378
          %v1581 = vadd.f32 %v1580, %v1380
          %v1582 = vadd.f32 %v1581, %v1382
          %v1583 = vadd.f32 %v1582, %v1384
          %v1584 = vadd.f32 %v1583, %v1386
          %v1585 = vadd.f32 %v1584, %v1388
          %v1586 = vadd.f32 %v1585, %v1390
          %v1587 = vadd.f32 %v1586, %v1392
          %v1588 = vadd.f32 %v1587, %v1394
          %v1589 = vadd.f32 %v1588, %v1396
          %v1590 = vadd.f32 %v1589, %v1398
          %v1591 = vadd.f32 %v1590, %v1400
          %v1592 = vadd.f32 %v1591, %v1402
          %v1593 = vadd.f32 %v1592, %v1404
          %v1594 = vadd.f32 %v1593, %v1406
          %v1595 = vadd.f32 %v1594, %v1408
          %v1596 = vadd.f32 %v1595, %v1410
          %v1597 = vadd.f32 %v1596, %v1412
          %v1598 = vadd.f32 %v1597, %v1414
          %v1599 = vadd.f32 %v1598, %v1416
          %v1600 = vadd.f32 %v1599, %v1418
          %v1601 = vadd.f32 %v1600, %v1420
          %v1602 = vadd.f32 %v1601, %v1422
          %v1603 = vadd.f32 %v1602, %v1424
          %v1604 = vadd.f32 %v1603, %v1426
          %v1605 = vrot.slane %v1604, 4
          %v1606 = vadd.f32 %v1604, %v1605
          %v1607 = vrot.slane %v1606, 2
          %v1608 = vadd.f32 %v1606, %v1607
          %v1609 = vrot.slane %v1608, 1
          %v1610 = vadd.f32 %v1608, %v1609
          %v1611 = vadd.f32 %v1573, %v1610
          %1612 = vst [vmem:[#allocation4] sm:$0x1] %v1611
          %v1613 = vld [vmem:[#allocation5] sm:$0x1]
          %v1614 = vmul.f32 %v1364, %v1364
          %v1615 = vmul.f32 %v1366, %v1366
          %v1616 = vmul.f32 %v1368, %v1368
          %v1617 = vmul.f32 %v1370, %v1370
          %v1618 = vmul.f32 %v1372, %v1372
          %v1619 = vmul.f32 %v1374, %v1374
          %v1620 = vmul.f32 %v1376, %v1376
          %v1621 = vmul.f32 %v1378, %v1378
          %v1622 = vmul.f32 %v1380, %v1380
          %v1623 = vmul.f32 %v1382, %v1382
          %v1624 = vmul.f32 %v1384, %v1384
          %v1625 = vmul.f32 %v1386, %v1386
          %v1626 = vmul.f32 %v1388, %v1388
          %v1627 = vmul.f32 %v1390, %v1390
          %v1628 = vmul.f32 %v1392, %v1392
          %v1629 = vmul.f32 %v1394, %v1394
          %v1630 = vmul.f32 %v1396, %v1396
          %v1631 = vmul.f32 %v1398, %v1398
          %v1632 = vmul.f32 %v1400, %v1400
          %v1633 = vmul.f32 %v1402, %v1402
          %v1634 = vmul.f32 %v1404, %v1404
          %v1635 = vmul.f32 %v1406, %v1406
          %v1636 = vmul.f32 %v1408, %v1408
          %v1637 = vmul.f32 %v1410, %v1410
          %v1638 = vmul.f32 %v1412, %v1412
          %v1639 = vmul.f32 %v1414, %v1414
          %v1640 = vmul.f32 %v1416, %v1416
          %v1641 = vmul.f32 %v1418, %v1418
          %v1642 = vmul.f32 %v1420, %v1420
          %v1643 = vmul.f32 %v1422, %v1422
          %v1644 = vmul.f32 %v1424, %v1424
          %v1645 = vmul.f32 %v1426, %v1426
          %v1646 = vadd.f32 %v1614, %v1615
          %v1647 = vadd.f32 %v1646, %v1616
          %v1648 = vadd.f32 %v1647, %v1617
          %v1649 = vadd.f32 %v1648, %v1618
          %v1650 = vadd.f32 %v1649, %v1619
          %v1651 = vadd.f32 %v1650, %v1620
          %v1652 = vadd.f32 %v1651, %v1621
          %v1653 = vadd.f32 %v1652, %v1622
          %v1654 = vadd.f32 %v1653, %v1623
          %v1655 = vadd.f32 %v1654, %v1624
          %v1656 = vadd.f32 %v1655, %v1625
          %v1657 = vadd.f32 %v1656, %v1626
          %v1658 = vadd.f32 %v1657, %v1627
          %v1659 = vadd.f32 %v1658, %v1628
          %v1660 = vadd.f32 %v1659, %v1629
          %v1661 = vadd.f32 %v1660, %v1630
          %v1662 = vadd.f32 %v1661, %v1631
          %v1663 = vadd.f32 %v1662, %v1632
          %v1664 = vadd.f32 %v1663, %v1633
          %v1665 = vadd.f32 %v1664, %v1634
          %v1666 = vadd.f32 %v1665, %v1635
          %v1667 = vadd.f32 %v1666, %v1636
          %v1668 = vadd.f32 %v1667, %v1637
          %v1669 = vadd.f32 %v1668, %v1638
          %v1670 = vadd.f32 %v1669, %v1639
          %v1671 = vadd.f32 %v1670, %v1640
          %v1672 = vadd.f32 %v1671, %v1641
          %v1673 = vadd.f32 %v1672, %v1642
          %v1674 = vadd.f32 %v1673, %v1643
          %v1675 = vadd.f32 %v1674, %v1644
          %v1676 = vadd.f32 %v1675, %v1645
          %v1677 = vrot.slane %v1676, 4
          %v1678 = vadd.f32 %v1676, %v1677
          %v1679 = vrot.slane %v1678, 2
          %v1680 = vadd.f32 %v1678, %v1679
          %v1681 = vrot.slane %v1680, 1
          %v1682 = vadd.f32 %v1680, %v1681
          %v1683 = vadd.f32 %v1613, %v1682
          %1684 = vst [vmem:[#allocation5] sm:$0x1] %v1683
        $region78: #{tpu_custom_call.1} parent=65 // pred_fallthru
          _
        %p1685 = scmp.eq.s32.totalorder %s19, 1
        %p1686 = pnand %p1685, %p1428
        %p1687 = pneg %p1686
        // Predicated region
        $region79: #{tpu_custom_call.1} parent=65 // pred_check
          _
        $region80: #{tpu_custom_call.1} parent=65 // pred_check_branch
          %1689 = sbr.rel (%p1686) target = $region82
        $region81: #{tpu_custom_call.1} parent=65 // pred_region
          %v1690 = vld [vmem:[#allocation2] sm:$0x3]
          %v1691 = vrcp.pop 256.0
          %v1692 = vmul.f32 %v1690, %v1691
          %v1693 = vld [vmem:[#allocation3] sm:$0x3]
          %v1694 = vmul.f32 %v1693, %v1691
          %v1695 = vmul.f32 %v1692, %v1692
          %v1696 = vsub.f32 %v1694, %v1695
          %v1697 = vadd.f32 %v1696, 1e-05
          %v1698 = vrsqrt.pop %v1697
          %1699 = vst [vmem:[#allocation2] sm:$0x3] %v1698
          %v1700 = vsub.f32 0.0, %v1692
          %v1701 = vmul.f32 %v1700, %v1698
          %1702 = vst [vmem:[#allocation3] sm:$0x3] %v1701
          %v1703 = vld [vmem:[#allocation4] sm:$0x1]
          %v1704 = vrcp.pop 512.0
          %v1705 = vmul.f32 %v1703, %v1704
          %v1706 = vld [vmem:[#allocation5] sm:$0x1]
          %v1707 = vmul.f32 %v1706, %v1704
          %v1708 = vmul.f32 %v1705, %v1705
          %v1709 = vsub.f32 %v1707, %v1708
          %v1710 = vadd.f32 %v1709, 1e-05
          %v1711 = vrsqrt.pop %v1710
          %1712 = vst [vmem:[#allocation4] sm:$0x1] %v1711
          %v1713 = vsub.f32 0.0, %v1705
          %v1714 = vmul.f32 %v1713, %v1711
          %1715 = vst [vmem:[#allocation5] sm:$0x1] %v1714
        $region82: #{tpu_custom_call.1} parent=65 // pred_fallthru
          _
        // Predicated region
        $region83: #{tpu_custom_call.1} parent=65 // pred_check
          %p1716 = pneg %p1685
        $region84: #{tpu_custom_call.1} parent=65 // pred_check_branch
          %1718 = sbr.rel (%p1716) target = $region86
        $region85: #{tpu_custom_call.1} parent=65 // pred_region
          %v1719 = vld [vmem:[#allocation2] sm:$0x3]
          %v1722 = vunpack.c.l.s4 1966171168
          %v1723 = vunpack.c.0.s8 %v1722
          %v1724 = vlaneseq
          %v1725 = vshrl.u32 %v1724, 7
          %v1726 = vsub.s32 %v1723, %v1725
          %v1727 = vrot.slane %v1719, %v1726
          %v1728 = vcombine.high %v1727, %v1727
          %v1730 = vunpack.c.l.s4 1966171168
          %v1731 = vunpack.c.0.s8 %v1730
          %v1732 = vlaneseq
          %v1733 = vshrl.u32 %v1732, 7
          %v1734 = vsub.s32 %v1731, %v1733
          %v1735 = vrot.slane %v1727, %v1734
          %v1737 = vunpack.c.l.s4 1966171168
          %v1738 = vunpack.c.0.s8 %v1737
          %v1739 = vlaneseq
          %v1740 = vshrl.u32 %v1739, 7
          %v1741 = vsub.s32 %v1738, %v1740
          %v1742 = vrot.slane %v1728, %v1741
          %v1743 = vlaneseq
          %v1744 = vshrl.u32 %v1743, 7
          %v1745 = vsub.s32 0, %v1744
          %v1746 = vrot.slane %v1735, %v1745
          %v1747 = vlaneseq
          %v1748 = vshrl.u32 %v1747, 7
          %v1749 = vsub.s32 0, %v1748
          %v1750 = vrot.slane %v1742, %v1749
          %v1753 = vmul.f32 %v1363, %v1746
          %v1754 = vmul.f32 %v1365, %v1746
          %v1755 = vmul.f32 %v1367, %v1746
          %v1756 = vmul.f32 %v1369, %v1746
          %v1757 = vmul.f32 %v1371, %v1746
          %v1758 = vmul.f32 %v1373, %v1746
          %v1759 = vmul.f32 %v1375, %v1746
          %v1760 = vmul.f32 %v1377, %v1746
          %v1761 = vmul.f32 %v1379, %v1746
          %v1762 = vmul.f32 %v1381, %v1746
          %v1763 = vmul.f32 %v1383, %v1746
          %v1764 = vmul.f32 %v1385, %v1746
          %v1765 = vmul.f32 %v1387, %v1746
          %v1766 = vmul.f32 %v1389, %v1746
          %v1767 = vmul.f32 %v1391, %v1746
          %v1768 = vmul.f32 %v1393, %v1746
          %v1769 = vmul.f32 %v1395, %v1750
          %v1770 = vmul.f32 %v1397, %v1750
          %v1771 = vmul.f32 %v1399, %v1750
          %v1772 = vmul.f32 %v1401, %v1750
          %v1773 = vmul.f32 %v1403, %v1750
          %v1774 = vmul.f32 %v1405, %v1750
          %v1775 = vmul.f32 %v1407, %v1750
          %v1776 = vmul.f32 %v1409, %v1750
          %v1777 = vmul.f32 %v1411, %v1750
          %v1778 = vmul.f32 %v1413, %v1750
          %v1779 = vmul.f32 %v1415, %v1750
          %v1780 = vmul.f32 %v1417, %v1750
          %v1781 = vmul.f32 %v1419, %v1750
          %v1782 = vmul.f32 %v1421, %v1750
          %v1783 = vmul.f32 %v1423, %v1750
          %v1784 = vmul.f32 %v1425, %v1750
          %v1785 = vld [vmem:[#allocation3] sm:$0x3]
          %v1788 = vunpack.c.l.s4 1966171168
          %v1789 = vunpack.c.0.s8 %v1788
          %v1790 = vlaneseq
          %v1791 = vshrl.u32 %v1790, 7
          %v1792 = vsub.s32 %v1789, %v1791
          %v1793 = vrot.slane %v1785, %v1792
          %v1794 = vcombine.high %v1793, %v1793
          %v1796 = vunpack.c.l.s4 1966171168
          %v1797 = vunpack.c.0.s8 %v1796
          %v1798 = vlaneseq
          %v1799 = vshrl.u32 %v1798, 7
          %v1800 = vsub.s32 %v1797, %v1799
          %v1801 = vrot.slane %v1793, %v1800
          %v1803 = vunpack.c.l.s4 1966171168
          %v1804 = vunpack.c.0.s8 %v1803
          %v1805 = vlaneseq
          %v1806 = vshrl.u32 %v1805, 7
          %v1807 = vsub.s32 %v1804, %v1806
          %v1808 = vrot.slane %v1794, %v1807
          %v1809 = vlaneseq
          %v1810 = vshrl.u32 %v1809, 7
          %v1811 = vsub.s32 0, %v1810
          %v1812 = vrot.slane %v1801, %v1811
          %v1813 = vlaneseq
          %v1814 = vshrl.u32 %v1813, 7
          %v1815 = vsub.s32 0, %v1814
          %v1816 = vrot.slane %v1808, %v1815
          %v1819 = vadd.f32 %v1753, %v1812
          %v1820 = vadd.f32 %v1754, %v1812
          %v1821 = vadd.f32 %v1755, %v1812
          %v1822 = vadd.f32 %v1756, %v1812
          %v1823 = vadd.f32 %v1757, %v1812
          %v1824 = vadd.f32 %v1758, %v1812
          %v1825 = vadd.f32 %v1759, %v1812
          %v1826 = vadd.f32 %v1760, %v1812
          %v1827 = vadd.f32 %v1761, %v1812
          %v1828 = vadd.f32 %v1762, %v1812
          %v1829 = vadd.f32 %v1763, %v1812
          %v1830 = vadd.f32 %v1764, %v1812
          %v1831 = vadd.f32 %v1765, %v1812
          %v1832 = vadd.f32 %v1766, %v1812
          %v1833 = vadd.f32 %v1767, %v1812
          %v1834 = vadd.f32 %v1768, %v1812
          %v1835 = vadd.f32 %v1769, %v1816
          %v1836 = vadd.f32 %v1770, %v1816
          %v1837 = vadd.f32 %v1771, %v1816
          %v1838 = vadd.f32 %v1772, %v1816
          %v1839 = vadd.f32 %v1773, %v1816
          %v1840 = vadd.f32 %v1774, %v1816
          %v1841 = vadd.f32 %v1775, %v1816
          %v1842 = vadd.f32 %v1776, %v1816
          %v1843 = vadd.f32 %v1777, %v1816
          %v1844 = vadd.f32 %v1778, %v1816
          %v1845 = vadd.f32 %v1779, %v1816
          %v1846 = vadd.f32 %v1780, %v1816
          %v1847 = vadd.f32 %v1781, %v1816
          %v1848 = vadd.f32 %v1782, %v1816
          %v1849 = vadd.f32 %v1783, %v1816
          %v1850 = vadd.f32 %v1784, %v1816
          %v1851 = vmax.f32 %v1819, 0.0
          %v1852 = vmax.f32 %v1820, 0.0
          %v1853 = vmax.f32 %v1821, 0.0
          %v1854 = vmax.f32 %v1822, 0.0
          %v1855 = vmax.f32 %v1823, 0.0
          %v1856 = vmax.f32 %v1824, 0.0
          %v1857 = vmax.f32 %v1825, 0.0
          %v1858 = vmax.f32 %v1826, 0.0
          %v1859 = vmax.f32 %v1827, 0.0
          %v1860 = vmax.f32 %v1828, 0.0
          %v1861 = vmax.f32 %v1829, 0.0
          %v1862 = vmax.f32 %v1830, 0.0
          %v1863 = vmax.f32 %v1831, 0.0
          %v1864 = vmax.f32 %v1832, 0.0
          %v1865 = vmax.f32 %v1833, 0.0
          %v1866 = vmax.f32 %v1834, 0.0
          %v1867 = vmax.f32 %v1835, 0.0
          %v1868 = vmax.f32 %v1836, 0.0
          %v1869 = vmax.f32 %v1837, 0.0
          %v1870 = vmax.f32 %v1838, 0.0
          %v1871 = vmax.f32 %v1839, 0.0
          %v1872 = vmax.f32 %v1840, 0.0
          %v1873 = vmax.f32 %v1841, 0.0
          %v1874 = vmax.f32 %v1842, 0.0
          %v1875 = vmax.f32 %v1843, 0.0
          %v1876 = vmax.f32 %v1844, 0.0
          %v1877 = vmax.f32 %v1845, 0.0
          %v1878 = vmax.f32 %v1846, 0.0
          %v1879 = vmax.f32 %v1847, 0.0
          %v1880 = vmax.f32 %v1848, 0.0
          %v1881 = vmax.f32 %v1849, 0.0
          %v1882 = vmax.f32 %v1850, 0.0
          %v1883 = vld [vmem:[#allocation4] sm:$0x1]
          %v1885 = vlaneseq
          %v1886 = vshrl.u32 %v1885, 7
          %v1887 = vsub.s32 0, %v1886
          %v1888 = vrot.slane %v1883, %v1887
          %v1890 = vmul.f32 %v1364, %v1888
          %v1891 = vmul.f32 %v1366, %v1888
          %v1892 = vmul.f32 %v1368, %v1888
          %v1893 = vmul.f32 %v1370, %v1888
          %v1894 = vmul.f32 %v1372, %v1888
          %v1895 = vmul.f32 %v1374, %v1888
          %v1896 = vmul.f32 %v1376, %v1888
          %v1897 = vmul.f32 %v1378, %v1888
          %v1898 = vmul.f32 %v1380, %v1888
          %v1899 = vmul.f32 %v1382, %v1888
          %v1900 = vmul.f32 %v1384, %v1888
          %v1901 = vmul.f32 %v1386, %v1888
          %v1902 = vmul.f32 %v1388, %v1888
          %v1903 = vmul.f32 %v1390, %v1888
          %v1904 = vmul.f32 %v1392, %v1888
          %v1905 = vmul.f32 %v1394, %v1888
          %v1906 = vmul.f32 %v1396, %v1888
          %v1907 = vmul.f32 %v1398, %v1888
          %v1908 = vmul.f32 %v1400, %v1888
          %v1909 = vmul.f32 %v1402, %v1888
          %v1910 = vmul.f32 %v1404, %v1888
          %v1911 = vmul.f32 %v1406, %v1888
          %v1912 = vmul.f32 %v1408, %v1888
          %v1913 = vmul.f32 %v1410, %v1888
          %v1914 = vmul.f32 %v1412, %v1888
          %v1915 = vmul.f32 %v1414, %v1888
          %v1916 = vmul.f32 %v1416, %v1888
          %v1917 = vmul.f32 %v1418, %v1888
          %v1918 = vmul.f32 %v1420, %v1888
          %v1919 = vmul.f32 %v1422, %v1888
          %v1920 = vmul.f32 %v1424, %v1888
          %v1921 = vmul.f32 %v1426, %v1888
          %v1922 = vld [vmem:[#allocation5] sm:$0x1]
          %v1924 = vlaneseq
          %v1925 = vshrl.u32 %v1924, 7
          %v1926 = vsub.s32 0, %v1925
          %v1927 = vrot.slane %v1922, %v1926
          %v1929 = vadd.f32 %v1890, %v1927
          %v1930 = vadd.f32 %v1891, %v1927
          %v1931 = vadd.f32 %v1892, %v1927
          %v1932 = vadd.f32 %v1893, %v1927
          %v1933 = vadd.f32 %v1894, %v1927
          %v1934 = vadd.f32 %v1895, %v1927
          %v1935 = vadd.f32 %v1896, %v1927
          %v1936 = vadd.f32 %v1897, %v1927
          %v1937 = vadd.f32 %v1898, %v1927
          %v1938 = vadd.f32 %v1899, %v1927
          %v1939 = vadd.f32 %v1900, %v1927
          %v1940 = vadd.f32 %v1901, %v1927
          %v1941 = vadd.f32 %v1902, %v1927
          %v1942 = vadd.f32 %v1903, %v1927
          %v1943 = vadd.f32 %v1904, %v1927
          %v1944 = vadd.f32 %v1905, %v1927
          %v1945 = vadd.f32 %v1906, %v1927
          %v1946 = vadd.f32 %v1907, %v1927
          %v1947 = vadd.f32 %v1908, %v1927
          %v1948 = vadd.f32 %v1909, %v1927
          %v1949 = vadd.f32 %v1910, %v1927
          %v1950 = vadd.f32 %v1911, %v1927
          %v1951 = vadd.f32 %v1912, %v1927
          %v1952 = vadd.f32 %v1913, %v1927
          %v1953 = vadd.f32 %v1914, %v1927
          %v1954 = vadd.f32 %v1915, %v1927
          %v1955 = vadd.f32 %v1916, %v1927
          %v1956 = vadd.f32 %v1917, %v1927
          %v1957 = vadd.f32 %v1918, %v1927
          %v1958 = vadd.f32 %v1919, %v1927
          %v1959 = vadd.f32 %v1920, %v1927
          %v1960 = vadd.f32 %v1921, %v1927
          %v1961 = vmax.f32 %v1929, 0.0
          %v1962 = vmax.f32 %v1930, 0.0
          %v1963 = vmax.f32 %v1931, 0.0
          %v1964 = vmax.f32 %v1932, 0.0
          %v1965 = vmax.f32 %v1933, 0.0
          %v1966 = vmax.f32 %v1934, 0.0
          %v1967 = vmax.f32 %v1935, 0.0
          %v1968 = vmax.f32 %v1936, 0.0
          %v1969 = vmax.f32 %v1937, 0.0
          %v1970 = vmax.f32 %v1938, 0.0
          %v1971 = vmax.f32 %v1939, 0.0
          %v1972 = vmax.f32 %v1940, 0.0
          %v1973 = vmax.f32 %v1941, 0.0
          %v1974 = vmax.f32 %v1942, 0.0
          %v1975 = vmax.f32 %v1943, 0.0
          %v1976 = vmax.f32 %v1944, 0.0
          %v1977 = vmax.f32 %v1945, 0.0
          %v1978 = vmax.f32 %v1946, 0.0
          %v1979 = vmax.f32 %v1947, 0.0
          %v1980 = vmax.f32 %v1948, 0.0
          %v1981 = vmax.f32 %v1949, 0.0
          %v1982 = vmax.f32 %v1950, 0.0
          %v1983 = vmax.f32 %v1951, 0.0
          %v1984 = vmax.f32 %v1952, 0.0
          %v1985 = vmax.f32 %v1953, 0.0
          %v1986 = vmax.f32 %v1954, 0.0
          %v1987 = vmax.f32 %v1955, 0.0
          %v1988 = vmax.f32 %v1956, 0.0
          %v1989 = vmax.f32 %v1957, 0.0
          %v1990 = vmax.f32 %v1958, 0.0
          %v1991 = vmax.f32 %v1959, 0.0
          %v1992 = vmax.f32 %v1960, 0.0
          %v1993 = vld [vmem:[#allocation6] sm:$0x3]
          %v1994 = vadd.f32 %v1851, %v1852
          %v1995 = vadd.f32 %v1994, %v1853
          %v1996 = vadd.f32 %v1995, %v1854
          %v1997 = vadd.f32 %v1996, %v1855
          %v1998 = vadd.f32 %v1997, %v1856
          %v1999 = vadd.f32 %v1998, %v1857
          %v2000 = vadd.f32 %v1999, %v1858
          %v2001 = vadd.f32 %v2000, %v1859
          %v2002 = vadd.f32 %v2001, %v1860
          %v2003 = vadd.f32 %v2002, %v1861
          %v2004 = vadd.f32 %v2003, %v1862
          %v2005 = vadd.f32 %v2004, %v1863
          %v2006 = vadd.f32 %v2005, %v1864
          %v2007 = vadd.f32 %v2006, %v1865
          %v2008 = vadd.f32 %v2007, %v1866
          %v2009 = vrot.slane %v2008, 4
          %v2010 = vadd.f32 %v2008, %v2009
          %v2011 = vrot.slane %v2010, 2
          %v2012 = vadd.f32 %v2010, %v2011
          %v2013 = vrot.slane %v2012, 1
          %v2014 = vadd.f32 %v2012, %v2013
          %v2015 = vadd.f32 %v1867, %v1868
          %v2016 = vadd.f32 %v2015, %v1869
          %v2017 = vadd.f32 %v2016, %v1870
          %v2018 = vadd.f32 %v2017, %v1871
          %v2019 = vadd.f32 %v2018, %v1872
          %v2020 = vadd.f32 %v2019, %v1873
          %v2021 = vadd.f32 %v2020, %v1874
          %v2022 = vadd.f32 %v2021, %v1875
          %v2023 = vadd.f32 %v2022, %v1876
          %v2024 = vadd.f32 %v2023, %v1877
          %v2025 = vadd.f32 %v2024, %v1878
          %v2026 = vadd.f32 %v2025, %v1879
          %v2027 = vadd.f32 %v2026, %v1880
          %v2028 = vadd.f32 %v2027, %v1881
          %v2029 = vadd.f32 %v2028, %v1882
          %v2030 = vrot.slane %v2029, 4
          %v2031 = vadd.f32 %v2029, %v2030
          %v2032 = vrot.slane %v2031, 2
          %v2033 = vadd.f32 %v2031, %v2032
          %v2034 = vrot.slane %v2033, 1
          %v2035 = vadd.f32 %v2033, %v2034
          %vm2038 = vcmask 1041409
          %v2039 = vsel %vm2038, %v2035, %v2014
          %v2041 = vadd.f32 %v1993, %v2039
          %2042 = vst [vmem:[#allocation6] sm:$0x3] %v2041
          %v2043 = vld [vmem:[#allocation7] sm:$0x3]
          %v2044 = vadd.f32 %v1961, %v1962
          %v2045 = vadd.f32 %v2044, %v1963
          %v2046 = vadd.f32 %v2045, %v1964
          %v2047 = vadd.f32 %v2046, %v1965
          %v2048 = vadd.f32 %v2047, %v1966
          %v2049 = vadd.f32 %v2048, %v1967
          %v2050 = vadd.f32 %v2049, %v1968
          %v2051 = vadd.f32 %v2050, %v1969
          %v2052 = vadd.f32 %v2051, %v1970
          %v2053 = vadd.f32 %v2052, %v1971
          %v2054 = vadd.f32 %v2053, %v1972
          %v2055 = vadd.f32 %v2054, %v1973
          %v2056 = vadd.f32 %v2055, %v1974
          %v2057 = vadd.f32 %v2056, %v1975
          %v2058 = vadd.f32 %v2057, %v1976
          %v2059 = vrot.slane %v2058, 4
          %v2060 = vadd.f32 %v2058, %v2059
          %v2061 = vrot.slane %v2060, 2
          %v2062 = vadd.f32 %v2060, %v2061
          %v2063 = vrot.slane %v2062, 1
          %v2064 = vadd.f32 %v2062, %v2063
          %v2065 = vadd.f32 %v1977, %v1978
          %v2066 = vadd.f32 %v2065, %v1979
          %v2067 = vadd.f32 %v2066, %v1980
          %v2068 = vadd.f32 %v2067, %v1981
          %v2069 = vadd.f32 %v2068, %v1982
          %v2070 = vadd.f32 %v2069, %v1983
          %v2071 = vadd.f32 %v2070, %v1984
          %v2072 = vadd.f32 %v2071, %v1985
          %v2073 = vadd.f32 %v2072, %v1986
          %v2074 = vadd.f32 %v2073, %v1987
          %v2075 = vadd.f32 %v2074, %v1988
          %v2076 = vadd.f32 %v2075, %v1989
          %v2077 = vadd.f32 %v2076, %v1990
          %v2078 = vadd.f32 %v2077, %v1991
          %v2079 = vadd.f32 %v2078, %v1992
          %v2080 = vrot.slane %v2079, 4
          %v2081 = vadd.f32 %v2079, %v2080
          %v2082 = vrot.slane %v2081, 2
          %v2083 = vadd.f32 %v2081, %v2082
          %v2084 = vrot.slane %v2083, 1
          %v2085 = vadd.f32 %v2083, %v2084
          %v2088 = vsel %vm2038, %v2085, %v2064
          %v2090 = vadd.f32 %v2043, %v2088
          %2091 = vst [vmem:[#allocation7] sm:$0x3] %v2090
        $region86: #{tpu_custom_call.1} parent=65 // pred_fallthru
          _
        %p2092 = scmp.eq.s32.totalorder %s20, 1
        %p2093 = pnand %p1685, %p2092
        %p2094 = pneg %p2093
        // Predicated region
        $region87: #{tpu_custom_call.1} parent=65 // pred_check
          _
        $region88: #{tpu_custom_call.1} parent=65 // pred_check_branch
          %2096 = sbr.rel (%p2093) target = $region90
        $region89: #{tpu_custom_call.1} parent=65 // pred_region
          %v2097 = vld [vmem:[#allocation6] sm:$0x3]
          %v2098 = vld [vmem:[#allocation7] sm:$0x3]
          %v2099 = vmul.f32 %v2097, 0.00390625
          %v2100 = vmul.f32 %v2098, 0.00390625
          %v2101 = vld [vmem:[%s2] sm:$0xff]
          %v2102 = vld [vmem:[%s2 + $0x8] sm:$0xff]
          %v2103 = vld [vmem:[%s2 + $0x10] sm:$0xff]
          %v2104 = vld [vmem:[%s2 + $0x18] sm:$0xff]
          %v2105 = vld [vmem:[%s2 + $0x20] sm:$0xff]
          %v2106 = vld [vmem:[%s2 + $0x28] sm:$0xff]
          %v2107 = vld [vmem:[%s2 + $0x30] sm:$0xff]
          %v2108 = vld [vmem:[%s2 + $0x38] sm:$0xff]
          %v2109 = vld [vmem:[%s2 + $0x40] sm:$0xff]
          %v2110 = vld [vmem:[%s2 + $0x48] sm:$0xff]
          %v2111 = vld [vmem:[%s2 + $0x50] sm:$0xff]
          %v2112 = vld [vmem:[%s2 + $0x58] sm:$0xff]
          %v2113 = vld [vmem:[%s2 + $0x60] sm:$0xff]
          %v2114 = vld [vmem:[%s2 + $0x68] sm:$0xff]
          %v2115 = vld [vmem:[%s2 + $0x70] sm:$0xff]
          %v2116 = vld [vmem:[%s2 + $0x78] sm:$0xff]
          %v2117 = vld [vmem:[%s2 + $0x80] sm:$0xff]
          %v2118 = vld [vmem:[%s2 + $0x88] sm:$0xff]
          %v2119 = vld [vmem:[%s2 + $0x90] sm:$0xff]
          %v2120 = vld [vmem:[%s2 + $0x98] sm:$0xff]
          %v2121 = vld [vmem:[%s2 + $0xa0] sm:$0xff]
          %v2122 = vld [vmem:[%s2 + $0xa8] sm:$0xff]
          %v2123 = vld [vmem:[%s2 + $0xb0] sm:$0xff]
          %v2124 = vld [vmem:[%s2 + $0xb8] sm:$0xff]
          %v2125 = vld [vmem:[%s2 + $0xc0] sm:$0xff]
          %v2126 = vld [vmem:[%s2 + $0xc8] sm:$0xff]
          %v2127 = vld [vmem:[%s2 + $0xd0] sm:$0xff]
          %v2128 = vld [vmem:[%s2 + $0xd8] sm:$0xff]
          %v2129 = vld [vmem:[%s2 + $0xe0] sm:$0xff]
          %v2130 = vld [vmem:[%s2 + $0xe8] sm:$0xff]
          %v2131 = vld [vmem:[%s2 + $0xf0] sm:$0xff]
          %v2132 = vld [vmem:[%s2 + $0xf8] sm:$0xff]
          %v2133 = vld [vmem:[%s2 + $0x100] sm:$0xff]
          %v2134 = vld [vmem:[%s2 + $0x108] sm:$0xff]
          %v2135 = vld [vmem:[%s2 + $0x110] sm:$0xff]
          %v2136 = vld [vmem:[%s2 + $0x118] sm:$0xff]
          %v2137 = vld [vmem:[%s2 + $0x120] sm:$0xff]
          %v2138 = vld [vmem:[%s2 + $0x128] sm:$0xff]
          %v2139 = vld [vmem:[%s2 + $0x130] sm:$0xff]
          %v2140 = vld [vmem:[%s2 + $0x138] sm:$0xff]
          %v2141 = vld [vmem:[%s2 + $0x140] sm:$0xff]
          %v2142 = vld [vmem:[%s2 + $0x148] sm:$0xff]
          %v2143 = vld [vmem:[%s2 + $0x150] sm:$0xff]
          %v2144 = vld [vmem:[%s2 + $0x158] sm:$0xff]
          %v2145 = vld [vmem:[%s2 + $0x160] sm:$0xff]
          %v2146 = vld [vmem:[%s2 + $0x168] sm:$0xff]
          %v2147 = vld [vmem:[%s2 + $0x170] sm:$0xff]
          %v2148 = vld [vmem:[%s2 + $0x178] sm:$0xff]
          %v2149 = vld [vmem:[%s2 + $0x180] sm:$0xff]
          %v2150 = vld [vmem:[%s2 + $0x188] sm:$0xff]
          %v2151 = vld [vmem:[%s2 + $0x190] sm:$0xff]
          %v2152 = vld [vmem:[%s2 + $0x198] sm:$0xff]
          %v2153 = vld [vmem:[%s2 + $0x1a0] sm:$0xff]
          %v2154 = vld [vmem:[%s2 + $0x1a8] sm:$0xff]
          %v2155 = vld [vmem:[%s2 + $0x1b0] sm:$0xff]
          %v2156 = vld [vmem:[%s2 + $0x1b8] sm:$0xff]
          %v2157 = vld [vmem:[%s2 + $0x1c0] sm:$0xff]
          %v2158 = vld [vmem:[%s2 + $0x1c8] sm:$0xff]
          %v2159 = vld [vmem:[%s2 + $0x1d0] sm:$0xff]
          %v2160 = vld [vmem:[%s2 + $0x1d8] sm:$0xff]
          %v2161 = vld [vmem:[%s2 + $0x1e0] sm:$0xff]
          %v2162 = vld [vmem:[%s2 + $0x1e8] sm:$0xff]
          %v2163 = vld [vmem:[%s2 + $0x1f0] sm:$0xff]
          %v2164 = vld [vmem:[%s2 + $0x1f8] sm:$0xff]
          %2165 = vmatprep.subr.mxu0 %v2102
          %2166 = vmatpush1.msra.mxu0 %v2101
          %2167 = vmatprep.subr.mxu0 %v2104
          %2168 = vmatpush1.msra.mxu0 %v2103
          %2169 = vmatprep.subr.mxu0 %v2106
          %2170 = vmatpush1.msra.mxu0 %v2105
          %2171 = vmatprep.subr.mxu0 %v2108
          %2172 = vmatpush1.msra.mxu0 %v2107
          %2173 = vmatprep.subr.mxu0 %v2110
          %2174 = vmatpush1.msra.mxu0 %v2109
          %2175 = vmatprep.subr.mxu0 %v2112
          %2176 = vmatpush1.msra.mxu0 %v2111
          %2177 = vmatprep.subr.mxu0 %v2114
          %2178 = vmatpush1.msra.mxu0 %v2113
          %2179 = vmatprep.subr.mxu0 %v2116
          %2180 = vmatpush1.msra.mxu0 %v2115
          %2181 = vmatprep.subr.mxu0 %v2118
          %2182 = vmatpush1.msra.mxu0 %v2117
          %2183 = vmatprep.subr.mxu0 %v2120
          %2184 = vmatpush1.msra.mxu0 %v2119
          %2185 = vmatprep.subr.mxu0 %v2122
          %2186 = vmatpush1.msra.mxu0 %v2121
          %2187 = vmatprep.subr.mxu0 %v2124
          %2188 = vmatpush1.msra.mxu0 %v2123
          %2189 = vmatprep.subr.mxu0 %v2126
          %2190 = vmatpush1.msra.mxu0 %v2125
          %2191 = vmatprep.subr.mxu0 %v2128
          %2192 = vmatpush1.msra.mxu0 %v2127
          %2193 = vmatprep.subr.mxu0 %v2130
          %2194 = vmatpush1.msra.mxu0 %v2129
          %2195 = vmatprep.subr.mxu0 %v2132
          %2196 = vmatpush1.msra.mxu0 %v2131
          %2197 = vmatprep.subr.mxu0 %v2134
          %2198 = vmatpush1.msra.mxu0 %v2133
          %2199 = vmatprep.subr.mxu0 %v2136
          %2200 = vmatpush1.msra.mxu0 %v2135
          %2201 = vmatprep.subr.mxu0 %v2138
          %2202 = vmatpush1.msra.mxu0 %v2137
          %2203 = vmatprep.subr.mxu0 %v2140
          %2204 = vmatpush1.msra.mxu0 %v2139
          %2205 = vmatprep.subr.mxu0 %v2142
          %2206 = vmatpush1.msra.mxu0 %v2141
          %2207 = vmatprep.subr.mxu0 %v2144
          %2208 = vmatpush1.msra.mxu0 %v2143
          %2209 = vmatprep.subr.mxu0 %v2146
          %2210 = vmatpush1.msra.mxu0 %v2145
          %2211 = vmatprep.subr.mxu0 %v2148
          %2212 = vmatpush1.msra.mxu0 %v2147
          %2213 = vmatprep.subr.mxu0 %v2150
          %2214 = vmatpush1.msra.mxu0 %v2149
          %2215 = vmatprep.subr.mxu0 %v2152
          %2216 = vmatpush1.msra.mxu0 %v2151
          %2217 = vmatprep.subr.mxu0 %v2154
          %2218 = vmatpush1.msra.mxu0 %v2153
          %2219 = vmatprep.subr.mxu0 %v2156
          %2220 = vmatpush1.msra.mxu0 %v2155
          %2221 = vmatprep.subr.mxu0 %v2158
          %2222 = vmatpush1.msra.mxu0 %v2157
          %2223 = vmatprep.subr.mxu0 %v2160
          %2224 = vmatpush1.msra.mxu0 %v2159
          %2225 = vmatprep.subr.mxu0 %v2162
          %2226 = vmatpush1.msra.mxu0 %v2161
          %2227 = vmatprep.subr.mxu0 %v2164
          %2228 = vmatpush1.msra.mxu0 %v2163
          %2229 = vmatprep.mubr.f32.mxu0 %v2100
          %2230 = vmatmul.mubr.f32.gmra.mrb[0].mxu0 %v2099
          %v2231 = vpop.f32.mrb[0].mxu0
          %v2232 = vadd.f32 0.0, %v2231
          %v2233 = vpop.f32.mrb[0].mxu0
          %v2234 = vadd.f32 0.0, %v2233
          %2235 = vdwg.mxu0
          %v2238 = vcombine.low %v2232, %v2234
          %v2240 = vunpack.c.l.s4 1983009808
          %v2241 = vunpack.c.0.s8 %v2240
          %v2242 = vlaneseq
          %v2243 = vshrl.u32 %v2242, 7
          %v2244 = vsub.s32 %v2241, %v2243
          %v2245 = vrot.slane %v2238, %v2244
          %2247 = vst [vmem:[#allocation9] sm:$0xf] %v2245
        $region90: #{tpu_custom_call.1} parent=65 // pred_fallthru
          _
        // Predicated region
        $region91: #{tpu_custom_call.1} parent=65 // pred_check
          %p2248 = pneg %p108
        $region92: #{tpu_custom_call.1} parent=65 // pred_check_branch
          %2250 = sbr.rel (%p2248) target = $region94
        $region93: #{tpu_custom_call.1} parent=65 // pred_region
          %s2252 = ssub.s32 64, 64
          %2253 = vsyncadd [#allocation10], %s2252
          %s2255 = sshll.u32 [#allocation9], 4
          %s2256 = int_to_ptr.vmem [resolvable:$true] %s2255
          %2258 = dma.vmem_to_hbm [thread:$0]  %s2256, 64, %s3, [#allocation10]
        $region94: #{tpu_custom_call.1} parent=65 // pred_fallthru
          _
        // Predicated region
        $region95: #{tpu_custom_call.1} parent=65 // pred_check
          %p2259 = pneg %p108
        $region96: #{tpu_custom_call.1} parent=65 // pred_check_branch
          %2261 = sbr.rel (%p2259) target = $region98
        $region97: #{tpu_custom_call.1} parent=65 // pred_region
          %2262 = dma.done [#allocation10], 64
        $region98: #{tpu_custom_call.1} parent=65 // pred_fallthru
          _
      $region66: #{tpu_custom_call.1} parent=5 // pred_fallthru
        _
      %p2263 = scmp.le.s32.totalorder 2, %s10
      // Predicated region
      $region99: #{tpu_custom_call.1} parent=5 // pred_check
        %p2264 = pneg %p2263
      $region100: #{tpu_custom_call.1} parent=5 // pred_check_branch
        %2266 = sbr.rel (%p2264) target = $region102
      $region101: #{tpu_custom_call.1} parent=5 // pred_region
        %s2267 = ssub.s32 %s10, 2
      $region102: #{tpu_custom_call.1} parent=5 // pred_fallthru
        _
    $region6: #{tpu_custom_call.1} parent=1 // loop_footer
      %s14 = sadd.s32 1, %s10
    $region7: #{tpu_custom_call.1} parent=1 // loop_footer_branch
      %9 = sbr.rel target = $region3
    $region8: #{tpu_custom_call.1} parent=1 // loop_exit
      _
    %2268 = vsyncpa [#allocation10], 1
    %s2269 = scalar_lea.sflag [#allocation10], 1
    %2270 = vsyncpa %s2269, 1

</llo_original>
